<compile_context>
chip_gen: v7x
topology: tpu7x:2x2x1
jax: 0.10.0
libtpu: 0.0.40
codegen_flags: <defaults>
</compile_context>

<pallas_src>
import jax
import jax.numpy as jnp
from jax import lax
from jax.experimental import pallas as pl
from jax.experimental.pallas import tpu as pltpu

NEG_SLOPE = 0.1          # KPConv blocks use LeakyReLU(0.1)
PAD = 128                # lane-padded channel width

# ------------------------- model hyper-parameters (config) -------------------------
IN_FEATS_DIM = 1
FIRST_FEATS_DIM = 32
GNN_FEATS_DIM = 32
FINAL_FEATS_DIM = 32
CONDITION_FEATURE = True      # weight packing below realises the (True, True) branch
ADD_CROSS_OVERLAP = True

N_FINE = 64           # points at the finest level (src + tgt)
N_COARSE = 32         # points at the coarse level (stride-2 subsample)
LEN_SRC_C = 16        # batch['stack_lengths'][-1][0]

# ----------------------------- packed-slab index layout -----------------------------
# Weight slab: (N_W, 128, 128) bf16
(W_E1W1, W_E1W2, W_E1WS,
 W_E2W1, W_E2W2, W_E2WS,
 W_E3W1, W_E3W2, W_E3WS,
 W_BW, W_GW, W_PW, W_DFT, W_DSK) = range(14)
N_W = 14

# Bias / row slab: (N_B, 128) f32
(B_W0, B_B0,
 B_E1B1, B_E1B2, B_E1BS,
 B_E2B1, B_E2B2, B_E2BS,
 B_E3B1, B_E3B2, B_E3BS,
 B_BB, B_GB, B_PB, B_DB, B_DSA) = range(16)
N_B = 16


# =================================== fused Pallas kernel ===================================

def _kpfcnn_kernel(feat_ref, invt_ref, w_ref, b_ref, out_ref, stage_ref):
    """Entire KPFCNN forward (encoder -> bottle -> gnn -> proj -> saliency -> decoder -> head)."""
    bf16, f32 = jnp.bfloat16, jnp.float32

    def lrelu(v):
        return jnp.maximum(v, NEG_SLOPE * v)          # 2 VALU ops, no compare/select

    def brow(i):
        return b_ref[pl.ds(i, 1), :]                  # (1, PAD) f32, static view

    def mm(a_bf16, wi):
        # bf16 MXU operands (cast hoisted by callers), f32 accumulation.
        return jnp.dot(a_bf16, w_ref[wi], preferred_element_type=f32)

    def resblock(x, iw1, ib1, iw2, ib2, iws, ibs):
        # Bottleneck residual block: lrelu( lrelu(x@w1+b1)@w2+b2 + x@ws+bs )
        xb = x.astype(bf16)                            # single cast, shared by w1 / ws paths
        h = lrelu(mm(xb, iw1) + brow(ib1))
        y = mm(h.astype(bf16), iw2) + brow(ib2) + mm(xb, iws) + brow(ibs)
        return lrelu(y)

    # ----- encoder -----
    # TODO(synk): block_decider KPConv blocks are external; replaced by pointwise
    # linear / bottleneck-residual blocks (no neighbourhood aggregation).
    # 'simple' 1 -> 16: K=1 matmul done as a VPU outer product (no MXU K=1 dot).
    x = lrelu(feat_ref[...] * brow(B_W0) + brow(B_B0))                     # (Nf, PAD)
    x = resblock(x, W_E1W1, B_E1B1, W_E1W2, B_E1B2, W_E1WS, B_E1BS)
    skip_b = x.astype(bf16)                                                # encoder skip (32 ch), cast once
    x = resblock(x, W_E2W1, B_E2B1, W_E2W2, B_E2B2, W_E2WS, B_E2BS)

    # TODO(synk): stride-2 subsample stands in for neighbourhood max-pool; done as a
    # sublane-strided slice through a VMEM staging scratch (no one-hot MXU dot).
    stage_ref[...] = x
    x = stage_ref[pl.ds(0, N_COARSE, stride=2), :]                         # (Nc, PAD)
    x = resblock(x, W_E3W1, B_E3B1, W_E3W2, B_E3B2, W_E3WS, B_E3BS)

    # ----- bottleneck 1x1 conv + GNN stand-in + fused proj_gnn / proj_score -----
    # TODO(synk): GCN self/cross attention is external; replaced by a shared
    # pointwise linear + LeakyReLU (identical for src and tgt, so applied jointly).
    x = mm(x.astype(bf16), W_BW) + brow(B_BB)                              # bottle
    x = lrelu(mm(x.astype(bf16), W_GW) + brow(B_GB))                       # gnn stand-in
    # W_PW has proj_gnn in cols 0:32 and the composed proj_score in col 32.
    fp = mm(x.astype(bf16), W_PW) + brow(B_PB)                             # (Nc, PAD)

    # ----- L2-normalized GNN feats + temperature-scaled cross softmax saliency -----
    lane_c = lax.broadcasted_iota(jnp.int32, (N_COARSE, PAD), 1)
    fg = jnp.where(lane_c < GNN_FEATS_DIM, fp, 0.0)                        # raw gnn feats
    fg_norm = fg * lax.rsqrt(jnp.maximum(
        jnp.sum(fg * fg, axis=1, keepdims=True), 1e-24))                   # F.normalize

    inv_t = invt_ref[0, 0]
    src_n = fg_norm[:LEN_SRC_C] * inv_t                                    # fold 1/T here
    tgt_n = fg_norm[LEN_SRC_C:]
    dn = (((1,), (1,)), ((), ()))                                          # A @ B^T form
    ip = lax.dot_general(src_n, tgt_n, dn, preferred_element_type=f32)     # (ns, nt)
    ipt = lax.dot_general(tgt_n, src_n, dn, preferred_element_type=f32)    # == ip.T

    def row_softmax(z):
        e = jnp.exp(z - jnp.max(z, axis=1, keepdims=True))
        return e * pl.reciprocal(jnp.sum(e, axis=1, keepdims=True), approx=True)

    p1 = row_softmax(ip)                                                   # (ns, nt)
    p2 = row_softmax(ipt)                                                  # (nt, ns)

    dsa = brow(B_DSA)                                                      # decoder saliency row of last_w
    score_col = fp[:, GNN_FEATS_DIM:GNN_FEATS_DIM + 1]                     # (Nc, 1) proj_score
    # (p @ scores) * dec_sal_row  ==  p @ (scores * dec_sal_row): lane-dense dots.
    sal_src = jnp.dot(p1, score_col[LEN_SRC_C:] * dsa,
                      preferred_element_type=f32)                          # (ns, PAD)
    sal_tgt = jnp.dot(p2, score_col[:LEN_SRC_C] * dsa,
                      preferred_element_type=f32)                          # (nt, PAD)

    # ----- decoder: last_unary with split weights, nearest-upsample via strided stores -----
    # W_DFT has rows 0:32 = last_w rows for gnn feats and row 32 = last_w row for the
    # overlap score (which sits at lane 32 of fp), so one dot covers both.
    y_c = mm(fp.astype(bf16), W_DFT) + jnp.concatenate([sal_src, sal_tgt], axis=0)   # (Nc, PAD)
    # nearest upsample: duplicate coarse row c into fine rows 2c and 2c+1.
    stage_ref[pl.ds(0, N_COARSE, stride=2), :] = y_c
    stage_ref[pl.ds(1, N_COARSE, stride=2), :] = y_c
    y = stage_ref[...] + mm(skip_b, W_DSK) + brow(B_DB)                    # (Nf, PAD)

    # ----- final head: split / sigmoid / L2 normalize -----
    lane_f = lax.broadcasted_iota(jnp.int32, (N_FINE, PAD), 1)
    fmask = lane_f < FINAL_FEATS_DIM
    f = jnp.where(fmask, y, 0.0)
    f = f * lax.rsqrt(jnp.maximum(jnp.sum(f * f, axis=1, keepdims=True), 1e-24))
    # numerically-safe sigmoid (EUP tanh): always finite and in [0,1], so the
    # reference clamp(0,1) and isnan/isinf regular_score are no-ops.
    sig = 0.5 * (jnp.tanh(0.5 * y) + 1.0)
    smask = (lane_f == FINAL_FEATS_DIM) | (lane_f == FINAL_FEATS_DIM + 1)
    out_ref[...] = jnp.where(fmask, f, jnp.where(smask, sig, 0.0))


# =============================== parameter construction ===============================

def init_params(key):
    def w(k, ci, co):
        return (1.0 / jnp.sqrt(ci)) * jax.random.normal(k, (ci, co), jnp.float32)

    def b(k, co):
        return 0.01 * jax.random.normal(k, (co,), jnp.float32)

    def resnet_p(k, ci, co):
        ch = max(co // 4, 1)
        k1, k2, k3, k4, k5, k6 = jax.random.split(k, 6)
        return dict(w1=w(k1, ci, ch), b1=b(k2, ch),
                    w2=w(k3, ch, co), b2=b(k4, co),
                    ws=w(k5, ci, co), bs=b(k6, co))

    keys = jax.random.split(key, 16)
    p = {}
    # encoder (architecture = [simple, resnetb, resnetb_strided, resnetb, nearest_upsample, last_unary])
    p["enc0_w"] = w(keys[0], IN_FEATS_DIM, FIRST_FEATS_DIM // 2)   # simple -> out_dim//2 = 16
    p["enc0_b"] = b(keys[1], FIRST_FEATS_DIM // 2)
    p["enc1"] = resnet_p(keys[2], 16, 32)                          # resnetb
    p["enc2"] = resnet_p(keys[3], 32, 32)                          # resnetb_strided
    p["enc3"] = resnet_p(keys[4], 32, 64)                          # resnetb (coarse level)
    # bottleneck + gnn head
    p["bottle_w"] = w(keys[5], 64, GNN_FEATS_DIM)
    p["bottle_b"] = b(keys[6], GNN_FEATS_DIM)
    p["gnn_w"] = w(keys[7], GNN_FEATS_DIM, GNN_FEATS_DIM)
    p["gnn_b"] = b(keys[8], GNN_FEATS_DIM)
    p["proj_gnn_w"] = w(keys[9], GNN_FEATS_DIM, GNN_FEATS_DIM)
    p["proj_gnn_b"] = b(keys[10], GNN_FEATS_DIM)
    p["proj_score_w"] = w(keys[11], GNN_FEATS_DIM, 1)
    p["proj_score_b"] = b(keys[12], 1)
    # decoder: last_unary maps (gnn_feats + 2 + skip_dim) -> final_feats_dim + 2
    p["last_w"] = w(keys[13], GNN_FEATS_DIM + 2 + 32, FINAL_FEATS_DIM + 2)
    p["last_b"] = b(keys[14], FINAL_FEATS_DIM + 2)
    p["epsilon"] = jnp.float32(-5.0)
    return p


def pack_params(p):
    """Pad/cast weights into TWO slabs (one bf16 weight tensor, one f32 bias/row tensor)."""
    f32 = jnp.float32

    def pad_mat(a):
        return jnp.zeros((PAD, PAD), f32).at[:a.shape[0], :a.shape[1]].set(a)

    def pad_vec(v):
        v = jnp.reshape(v, (-1,))
        return jnp.zeros((PAD,), f32).at[:v.shape[0]].set(v)

    w = [None] * N_W
    b = [None] * N_B

    # encoder
    b[B_W0] = pad_vec(p["enc0_w"])          # (1,16) 'simple' weight as a lane row
    b[B_B0] = pad_vec(p["enc0_b"])
    for name, iw, ib in (("enc1", (W_E1W1, W_E1W2, W_E1WS), (B_E1B1, B_E1B2, B_E1BS)),
                         ("enc2", (W_E2W1, W_E2W2, W_E2WS), (B_E2B1, B_E2B2, B_E2BS)),
                         ("enc3", (W_E3W1, W_E3W2, W_E3WS), (B_E3B1, B_E3B2, B_E3BS))):
        blk = p[name]
        w[iw[0]] = pad_mat(blk["w1"]); b[ib[0]] = pad_vec(blk["b1"])
        w[iw[1]] = pad_mat(blk["w2"]); b[ib[1]] = pad_vec(blk["b2"])
        w[iw[2]] = pad_mat(blk["ws"]); b[ib[2]] = pad_vec(blk["bs"])

    # bottleneck + gnn head
    w[W_BW] = pad_mat(p["bottle_w"]); b[B_BB] = pad_vec(p["bottle_b"])
    w[W_GW] = pad_mat(p["gnn_w"]);    b[B_GB] = pad_vec(p["gnn_b"])

    # Fuse proj_score into proj_gnn: score = (x@Wg+bg)@Ws+bs = x@(Wg@Ws) + (bg@Ws+bs)
    comb_w = jnp.concatenate([p["proj_gnn_w"], p["proj_gnn_w"] @ p["proj_score_w"]], axis=1)
    comb_b = jnp.concatenate(
        [p["proj_gnn_b"], p["proj_gnn_b"] @ p["proj_score_w"] + p["proj_score_b"]], axis=0)
    w[W_PW] = pad_mat(comb_w); b[B_PB] = pad_vec(comb_b)

    # Decoder last_unary rows map the concat [score(1), saliency(1), gnn_feats(32), skip(32)]
    # (condition=True, add_cross_overlap=True configuration).
    lw, lb = p["last_w"], p["last_b"]
    dft = jnp.zeros((PAD, PAD), f32)
    dft = dft.at[:GNN_FEATS_DIM, :lw.shape[1]].set(lw[2:2 + GNN_FEATS_DIM])   # gnn feats rows
    dft = dft.at[GNN_FEATS_DIM, :lw.shape[1]].set(lw[0])                      # score row
    w[W_DFT] = dft
    w[W_DSK] = pad_mat(lw[2 + GNN_FEATS_DIM:])                                # skip rows
    b[B_DSA] = pad_vec(lw[1])                                                 # saliency row
    b[B_DB] = pad_vec(lb)

    return {"w": jnp.stack(w, axis=0).astype(jnp.bfloat16),    # (N_W, 128, 128) bf16
            "b": jnp.stack(b, axis=0)}                         # (N_B, 128) f32


# ==================================== forward pass ====================================

def kpfcnn_forward(packed, epsilon, features, pcd_f, pcd_c):
    del pcd_f, pcd_c  # TODO(synk): real KPConv / GCN use point coordinates & neighbourhoods.
    inv_t = jnp.reshape(1.0 / (jnp.exp(epsilon) + 0.03), (1, 1)).astype(jnp.float32)

    vmem = pl.BlockSpec(memory_space=pltpu.MemorySpace.VMEM)
    smem = pl.BlockSpec(memory_space=pltpu.MemorySpace.SMEM)

    # TODO(synk): with multiple point-cloud pairs, add a leading batch grid axis and
    # compiler_params=pltpu.CompilerParams(dimension_semantics=("parallel",)) to shard
    # across v7x TensorCores and raise MXU row occupancy on v6e; single pair -> grid-less.
    out = pl.pallas_call(
        _kpfcnn_kernel,
        out_shape=jax.ShapeDtypeStruct((N_FINE, PAD), jnp.float32),
        in_specs=[vmem, smem, vmem, vmem],
        out_specs=vmem,
        scratch_shapes=[pltpu.VMEM((N_FINE, PAD), jnp.float32)],   # subsample / upsample staging
    )(features, inv_t, packed["w"], packed["b"])

    feats_f = out[:, :FINAL_FEATS_DIM]
    scores_overlap = out[:, FINAL_FEATS_DIM]
    scores_saliency = out[:, FINAL_FEATS_DIM + 1]
    return feats_f, scores_overlap, scores_saliency


# ======================================== main ========================================

if __name__ == "__main__":
    key = jax.random.PRNGKey(0)
    k_param, k_feat, k_pf, k_pc = jax.random.split(key, 4)

    params = init_params(k_param)
    packed = pack_params(params)
    features = jax.random.normal(k_feat, (N_FINE, IN_FEATS_DIM), jnp.float32)
    pcd_f = jax.random.normal(k_pf, (N_FINE, 3), jnp.float32)
    pcd_c = jax.random.normal(k_pc, (N_COARSE, 3), jnp.float32)

    fwd = jax.jit(kpfcnn_forward)
    feats_f, scores_overlap, scores_saliency = fwd(
        packed, params["epsilon"], features, pcd_f, pcd_c)

    jax.block_until_ready((feats_f, scores_overlap, scores_saliency))

    assert feats_f.shape == (N_FINE, FINAL_FEATS_DIM)
    assert scores_overlap.shape == (N_FINE,)
    assert scores_saliency.shape == (N_FINE,)
    assert bool(jnp.all(jnp.isfinite(feats_f)))
    assert bool(jnp.all((scores_overlap >= 0) & (scores_overlap <= 1)))
    assert bool(jnp.all((scores_saliency >= 0) & (scores_saliency <= 1)))
    print("KERNEL_OK")
</pallas_src>

<mosaic_0001>
module attributes {stable_mosaic.version = 11 : i64} {
  func.func @_kpfcnn_kernel(%arg0: memref<64x1xf32, #tpu.memory_space<vmem>>, %arg1: memref<1x1xf32, #tpu.memory_space<smem>>, %arg2: memref<14x128x128xbf16, #tpu.memory_space<vmem>>, %arg3: memref<16x128xf32, #tpu.memory_space<vmem>>, %arg4: memref<64x128xf32, #tpu.memory_space<vmem>>, %arg5: memref<64x128xf32, #tpu.memory_space<vmem>>) attributes {dimension_semantics = [], scalar_prefetch = 0 : i64, scratch_operands = 1 : i64, tpu.core_type = #tpu.core_type<tc>} {
    %c0 = arith.constant 0 : index
    %c0_0 = arith.constant 0 : index
    %0 = vector.load %arg0[%c0, %c0_0] : memref<64x1xf32, #tpu.memory_space<vmem>>, vector<64x1xf32>
    %c0_1 = arith.constant 0 : index
    %c0_2 = arith.constant 0 : index
    %1 = vector.load %arg3[%c0_1, %c0_2] : memref<16x128xf32, #tpu.memory_space<vmem>>, vector<1x128xf32>
    %2 = vector.broadcast %0 : vector<64x1xf32> to vector<64x128xf32>
    %3 = vector.broadcast %1 : vector<1x128xf32> to vector<64x128xf32>
    %4 = arith.mulf %2, %3 : vector<64x128xf32>
    %c1 = arith.constant 1 : index
    %c0_3 = arith.constant 0 : index
    %5 = vector.load %arg3[%c1, %c0_3] : memref<16x128xf32, #tpu.memory_space<vmem>>, vector<1x128xf32>
    %6 = vector.broadcast %5 : vector<1x128xf32> to vector<64x128xf32>
    %7 = arith.addf %4, %6 : vector<64x128xf32>
    %cst = arith.constant 1.000000e-01 : f32
    %8 = vector.broadcast %cst : f32 to vector<64x128xf32>
    %9 = arith.mulf %8, %7 : vector<64x128xf32>
    %10 = arith.maximumf %7, %9 : vector<64x128xf32>
    %11 = arith.truncf %10 : vector<64x128xf32> to vector<64x128xbf16>
    %c0_4 = arith.constant 0 : index
    %c0_5 = arith.constant 0 : index
    %c0_6 = arith.constant 0 : index
    %12 = vector.load %arg2[%c0_4, %c0_5, %c0_6] : memref<14x128x128xbf16, #tpu.memory_space<vmem>>, vector<1x128x128xbf16>
    %13 = vector.shape_cast %12 : vector<1x128x128xbf16> to vector<128x128xbf16>
    %cst_7 = arith.constant dense<0.000000e+00> : vector<64x128xf32>
    %14 = tpu.matmul %11, %13, %cst_7 {dimension_numbers = #tpu.dot_dimension_numbers<[1], [0], [0], [1], [0, 0, 1, 1], [], []>} : vector<64x128xbf16>, vector<128x128xbf16>, vector<64x128xf32> -> vector<64x128xf32>
    %c2 = arith.constant 2 : index
    %c0_8 = arith.constant 0 : index
    %15 = vector.load %arg3[%c2, %c0_8] : memref<16x128xf32, #tpu.memory_space<vmem>>, vector<1x128xf32>
    %16 = vector.broadcast %15 : vector<1x128xf32> to vector<64x128xf32>
    %17 = arith.addf %14, %16 : vector<64x128xf32>
    %cst_9 = arith.constant 1.000000e-01 : f32
    %18 = vector.broadcast %cst_9 : f32 to vector<64x128xf32>
    %19 = arith.mulf %18, %17 : vector<64x128xf32>
    %20 = arith.maximumf %17, %19 : vector<64x128xf32>
    %21 = arith.truncf %20 : vector<64x128xf32> to vector<64x128xbf16>
    %c1_10 = arith.constant 1 : index
    %c0_11 = arith.constant 0 : index
    %c0_12 = arith.constant 0 : index
    %22 = vector.load %arg2[%c1_10, %c0_11, %c0_12] : memref<14x128x128xbf16, #tpu.memory_space<vmem>>, vector<1x128x128xbf16>
    %23 = vector.shape_cast %22 : vector<1x128x128xbf16> to vector<128x128xbf16>
    %cst_13 = arith.constant dense<0.000000e+00> : vector<64x128xf32>
    %24 = tpu.matmul %21, %23, %cst_13 {dimension_numbers = #tpu.dot_dimension_numbers<[1], [0], [0], [1], [0, 0, 1, 1], [], []>} : vector<64x128xbf16>, vector<128x128xbf16>, vector<64x128xf32> -> vector<64x128xf32>
    %c3 = arith.constant 3 : index
    %c0_14 = arith.constant 0 : index
    %25 = vector.load %arg3[%c3, %c0_14] : memref<16x128xf32, #tpu.memory_space<vmem>>, vector<1x128xf32>
    %26 = vector.broadcast %25 : vector<1x128xf32> to vector<64x128xf32>
    %27 = arith.addf %24, %26 : vector<64x128xf32>
    %c2_15 = arith.constant 2 : index
    %c0_16 = arith.constant 0 : index
    %c0_17 = arith.constant 0 : index
    %28 = vector.load %arg2[%c2_15, %c0_16, %c0_17] : memref<14x128x128xbf16, #tpu.memory_space<vmem>>, vector<1x128x128xbf16>
    %29 = vector.shape_cast %28 : vector<1x128x128xbf16> to vector<128x128xbf16>
    %cst_18 = arith.constant dense<0.000000e+00> : vector<64x128xf32>
    %30 = tpu.matmul %11, %29, %cst_18 {dimension_numbers = #tpu.dot_dimension_numbers<[1], [0], [0], [1], [0, 0, 1, 1], [], []>} : vector<64x128xbf16>, vector<128x128xbf16>, vector<64x128xf32> -> vector<64x128xf32>
    %31 = arith.addf %27, %30 : vector<64x128xf32>
    %c4 = arith.constant 4 : index
    %c0_19 = arith.constant 0 : index
    %32 = vector.load %arg3[%c4, %c0_19] : memref<16x128xf32, #tpu.memory_space<vmem>>, vector<1x128xf32>
    %33 = vector.broadcast %32 : vector<1x128xf32> to vector<64x128xf32>
    %34 = arith.addf %31, %33 : vector<64x128xf32>
    %cst_20 = arith.constant 1.000000e-01 : f32
    %35 = vector.broadcast %cst_20 : f32 to vector<64x128xf32>
    %36 = arith.mulf %35, %34 : vector<64x128xf32>
    %37 = arith.maximumf %34, %36 : vector<64x128xf32>
    %38 = arith.truncf %37 : vector<64x128xf32> to vector<64x128xbf16>
    %39 = arith.truncf %37 : vector<64x128xf32> to vector<64x128xbf16>
    %c3_21 = arith.constant 3 : index
    %c0_22 = arith.constant 0 : index
    %c0_23 = arith.constant 0 : index
    %40 = vector.load %arg2[%c3_21, %c0_22, %c0_23] : memref<14x128x128xbf16, #tpu.memory_space<vmem>>, vector<1x128x128xbf16>
    %41 = vector.shape_cast %40 : vector<1x128x128xbf16> to vector<128x128xbf16>
    %cst_24 = arith.constant dense<0.000000e+00> : vector<64x128xf32>
    %42 = tpu.matmul %39, %41, %cst_24 {dimension_numbers = #tpu.dot_dimension_numbers<[1], [0], [0], [1], [0, 0, 1, 1], [], []>} : vector<64x128xbf16>, vector<128x128xbf16>, vector<64x128xf32> -> vector<64x128xf32>
    %c5 = arith.constant 5 : index
    %c0_25 = arith.constant 0 : index
    %43 = vector.load %arg3[%c5, %c0_25] : memref<16x128xf32, #tpu.memory_space<vmem>>, vector<1x128xf32>
    %44 = vector.broadcast %43 : vector<1x128xf32> to vector<64x128xf32>
    %45 = arith.addf %42, %44 : vector<64x128xf32>
    %cst_26 = arith.constant 1.000000e-01 : f32
    %46 = vector.broadcast %cst_26 : f32 to vector<64x128xf32>
    %47 = arith.mulf %46, %45 : vector<64x128xf32>
    %48 = arith.maximumf %45, %47 : vector<64x128xf32>
    %49 = arith.truncf %48 : vector<64x128xf32> to vector<64x128xbf16>
    %c4_27 = arith.constant 4 : index
    %c0_28 = arith.constant 0 : index
    %c0_29 = arith.constant 0 : index
    %50 = vector.load %arg2[%c4_27, %c0_28, %c0_29] : memref<14x128x128xbf16, #tpu.memory_space<vmem>>, vector<1x128x128xbf16>
    %51 = vector.shape_cast %50 : vector<1x128x128xbf16> to vector<128x128xbf16>
    %cst_30 = arith.constant dense<0.000000e+00> : vector<64x128xf32>
    %52 = tpu.matmul %49, %51, %cst_30 {dimension_numbers = #tpu.dot_dimension_numbers<[1], [0], [0], [1], [0, 0, 1, 1], [], []>} : vector<64x128xbf16>, vector<128x128xbf16>, vector<64x128xf32> -> vector<64x128xf32>
    %c6 = arith.constant 6 : index
    %c0_31 = arith.constant 0 : index
    %53 = vector.load %arg3[%c6, %c0_31] : memref<16x128xf32, #tpu.memory_space<vmem>>, vector<1x128xf32>
    %54 = vector.broadcast %53 : vector<1x128xf32> to vector<64x128xf32>
    %55 = arith.addf %52, %54 : vector<64x128xf32>
    %c5_32 = arith.constant 5 : index
    %c0_33 = arith.constant 0 : index
    %c0_34 = arith.constant 0 : index
    %56 = vector.load %arg2[%c5_32, %c0_33, %c0_34] : memref<14x128x128xbf16, #tpu.memory_space<vmem>>, vector<1x128x128xbf16>
    %57 = vector.shape_cast %56 : vector<1x128x128xbf16> to vector<128x128xbf16>
    %cst_35 = arith.constant dense<0.000000e+00> : vector<64x128xf32>
    %58 = tpu.matmul %39, %57, %cst_35 {dimension_numbers = #tpu.dot_dimension_numbers<[1], [0], [0], [1], [0, 0, 1, 1], [], []>} : vector<64x128xbf16>, vector<128x128xbf16>, vector<64x128xf32> -> vector<64x128xf32>
    %59 = arith.addf %55, %58 : vector<64x128xf32>
    %c7 = arith.constant 7 : index
    %c0_36 = arith.constant 0 : index
    %60 = vector.load %arg3[%c7, %c0_36] : memref<16x128xf32, #tpu.memory_space<vmem>>, vector<1x128xf32>
    %61 = vector.broadcast %60 : vector<1x128xf32> to vector<64x128xf32>
    %62 = arith.addf %59, %61 : vector<64x128xf32>
    %cst_37 = arith.constant 1.000000e-01 : f32
    %63 = vector.broadcast %cst_37 : f32 to vector<64x128xf32>
    %64 = arith.mulf %63, %62 : vector<64x128xf32>
    %65 = arith.maximumf %62, %64 : vector<64x128xf32>
    %c0_38 = arith.constant 0 : index
    %c0_39 = arith.constant 0 : index
    %66 = vector.load %arg5[%c0_38, %c0_39] : memref<64x128xf32, #tpu.memory_space<vmem>>, vector<64x128xf32>
    tpu.vector_store %arg5[%c0_38, %c0_39], %65 {strides = array<i32>} : memref<64x128xf32, #tpu.memory_space<vmem>>, vector<64x128xf32>,
    %c0_40 = arith.constant 0 : index
    %c0_41 = arith.constant 0 : index
    %67 = tpu.strided_load %arg5[%c0_40, %c0_41] {strides = array<i32: 2, 1>} : memref<64x128xf32, #tpu.memory_space<vmem>>, vector<32x128xf32>
    %68 = arith.truncf %67 : vector<32x128xf32> to vector<32x128xbf16>
    %c6_42 = arith.constant 6 : index
    %c0_43 = arith.constant 0 : index
    %c0_44 = arith.constant 0 : index
    %69 = vector.load %arg2[%c6_42, %c0_43, %c0_44] : memref<14x128x128xbf16, #tpu.memory_space<vmem>>, vector<1x128x128xbf16>
    %70 = vector.shape_cast %69 : vector<1x128x128xbf16> to vector<128x128xbf16>
    %cst_45 = arith.constant dense<0.000000e+00> : vector<32x128xf32>
    %71 = tpu.matmul %68, %70, %cst_45 {dimension_numbers = #tpu.dot_dimension_numbers<[1], [0], [0], [1], [0, 0, 1, 1], [], []>} : vector<32x128xbf16>, vector<128x128xbf16>, vector<32x128xf32> -> vector<32x128xf32>
    %c8 = arith.constant 8 : index
    %c0_46 = arith.constant 0 : index
    %72 = vector.load %arg3[%c8, %c0_46] : memref<16x128xf32, #tpu.memory_space<vmem>>, vector<1x128xf32>
    %73 = vector.broadcast %72 : vector<1x128xf32> to vector<32x128xf32>
    %74 = arith.addf %71, %73 : vector<32x128xf32>
    %cst_47 = arith.constant 1.000000e-01 : f32
    %75 = vector.broadcast %cst_47 : f32 to vector<32x128xf32>
    %76 = arith.mulf %75, %74 : vector<32x128xf32>
    %77 = arith.maximumf %74, %76 : vector<32x128xf32>
    %78 = arith.truncf %77 : vector<32x128xf32> to vector<32x128xbf16>
    %c7_48 = arith.constant 7 : index
    %c0_49 = arith.constant 0 : index
    %c0_50 = arith.constant 0 : index
    %79 = vector.load %arg2[%c7_48, %c0_49, %c0_50] : memref<14x128x128xbf16, #tpu.memory_space<vmem>>, vector<1x128x128xbf16>
    %80 = vector.shape_cast %79 : vector<1x128x128xbf16> to vector<128x128xbf16>
    %cst_51 = arith.constant dense<0.000000e+00> : vector<32x128xf32>
    %81 = tpu.matmul %78, %80, %cst_51 {dimension_numbers = #tpu.dot_dimension_numbers<[1], [0], [0], [1], [0, 0, 1, 1], [], []>} : vector<32x128xbf16>, vector<128x128xbf16>, vector<32x128xf32> -> vector<32x128xf32>
    %c9 = arith.constant 9 : index
    %c0_52 = arith.constant 0 : index
    %82 = vector.load %arg3[%c9, %c0_52] : memref<16x128xf32, #tpu.memory_space<vmem>>, vector<1x128xf32>
    %83 = vector.broadcast %82 : vector<1x128xf32> to vector<32x128xf32>
    %84 = arith.addf %81, %83 : vector<32x128xf32>
    %c8_53 = arith.constant 8 : index
    %c0_54 = arith.constant 0 : index
    %c0_55 = arith.constant 0 : index
    %85 = vector.load %arg2[%c8_53, %c0_54, %c0_55] : memref<14x128x128xbf16, #tpu.memory_space<vmem>>, vector<1x128x128xbf16>
    %86 = vector.shape_cast %85 : vector<1x128x128xbf16> to vector<128x128xbf16>
    %cst_56 = arith.constant dense<0.000000e+00> : vector<32x128xf32>
    %87 = tpu.matmul %68, %86, %cst_56 {dimension_numbers = #tpu.dot_dimension_numbers<[1], [0], [0], [1], [0, 0, 1, 1], [], []>} : vector<32x128xbf16>, vector<128x128xbf16>, vector<32x128xf32> -> vector<32x128xf32>
    %88 = arith.addf %84, %87 : vector<32x128xf32>
    %c10 = arith.constant 10 : index
    %c0_57 = arith.constant 0 : index
    %89 = vector.load %arg3[%c10, %c0_57] : memref<16x128xf32, #tpu.memory_space<vmem>>, vector<1x128xf32>
    %90 = vector.broadcast %89 : vector<1x128xf32> to vector<32x128xf32>
    %91 = arith.addf %88, %90 : vector<32x128xf32>
    %cst_58 = arith.constant 1.000000e-01 : f32
    %92 = vector.broadcast %cst_58 : f32 to vector<32x128xf32>
    %93 = arith.mulf %92, %91 : vector<32x128xf32>
    %94 = arith.maximumf %91, %93 : vector<32x128xf32>
    %95 = arith.truncf %94 : vector<32x128xf32> to vector<32x128xbf16>
    %c9_59 = arith.constant 9 : index
    %c0_60 = arith.constant 0 : index
    %c0_61 = arith.constant 0 : index
    %96 = vector.load %arg2[%c9_59, %c0_60, %c0_61] : memref<14x128x128xbf16, #tpu.memory_space<vmem>>, vector<1x128x128xbf16>
    %97 = vector.shape_cast %96 : vector<1x128x128xbf16> to vector<128x128xbf16>
    %cst_62 = arith.constant dense<0.000000e+00> : vector<32x128xf32>
    %98 = tpu.matmul %95, %97, %cst_62 {dimension_numbers = #tpu.dot_dimension_numbers<[1], [0], [0], [1], [0, 0, 1, 1], [], []>} : vector<32x128xbf16>, vector<128x128xbf16>, vector<32x128xf32> -> vector<32x128xf32>
    %c11 = arith.constant 11 : index
    %c0_63 = arith.constant 0 : index
    %99 = vector.load %arg3[%c11, %c0_63] : memref<16x128xf32, #tpu.memory_space<vmem>>, vector<1x128xf32>
    %100 = vector.broadcast %99 : vector<1x128xf32> to vector<32x128xf32>
    %101 = arith.addf %98, %100 : vector<32x128xf32>
    %102 = arith.truncf %101 : vector<32x128xf32> to vector<32x128xbf16>
    %c10_64 = arith.constant 10 : index
    %c0_65 = arith.constant 0 : index
    %c0_66 = arith.constant 0 : index
    %103 = vector.load %arg2[%c10_64, %c0_65, %c0_66] : memref<14x128x128xbf16, #tpu.memory_space<vmem>>, vector<1x128x128xbf16>
    %104 = vector.shape_cast %103 : vector<1x128x128xbf16> to vector<128x128xbf16>
    %cst_67 = arith.constant dense<0.000000e+00> : vector<32x128xf32>
    %105 = tpu.matmul %102, %104, %cst_67 {dimension_numbers = #tpu.dot_dimension_numbers<[1], [0], [0], [1], [0, 0, 1, 1], [], []>} : vector<32x128xbf16>, vector<128x128xbf16>, vector<32x128xf32> -> vector<32x128xf32>
    %c12 = arith.constant 12 : index
    %c0_68 = arith.constant 0 : index
    %106 = vector.load %arg3[%c12, %c0_68] : memref<16x128xf32, #tpu.memory_space<vmem>>, vector<1x128xf32>
    %107 = vector.broadcast %106 : vector<1x128xf32> to vector<32x128xf32>
    %108 = arith.addf %105, %107 : vector<32x128xf32>
    %cst_69 = arith.constant 1.000000e-01 : f32
    %109 = vector.broadcast %cst_69 : f32 to vector<32x128xf32>
    %110 = arith.mulf %109, %108 : vector<32x128xf32>
    %111 = arith.maximumf %108, %110 : vector<32x128xf32>
    %112 = arith.truncf %111 : vector<32x128xf32> to vector<32x128xbf16>
    %c11_70 = arith.constant 11 : index
    %c0_71 = arith.constant 0 : index
    %c0_72 = arith.constant 0 : index
    %113 = vector.load %arg2[%c11_70, %c0_71, %c0_72] : memref<14x128x128xbf16, #tpu.memory_space<vmem>>, vector<1x128x128xbf16>
    %114 = vector.shape_cast %113 : vector<1x128x128xbf16> to vector<128x128xbf16>
    %cst_73 = arith.constant dense<0.000000e+00> : vector<32x128xf32>
    %115 = tpu.matmul %112, %114, %cst_73 {dimension_numbers = #tpu.dot_dimension_numbers<[1], [0], [0], [1], [0, 0, 1, 1], [], []>} : vector<32x128xbf16>, vector<128x128xbf16>, vector<32x128xf32> -> vector<32x128xf32>
    %c13 = arith.constant 13 : index
    %c0_74 = arith.constant 0 : index
    %116 = vector.load %arg3[%c13, %c0_74] : memref<16x128xf32, #tpu.memory_space<vmem>>, vector<1x128xf32>
    %117 = vector.broadcast %116 : vector<1x128xf32> to vector<32x128xf32>
    %118 = arith.addf %115, %117 : vector<32x128xf32>
    %119 = tpu.iota {dimensions = array<i32: 1>} : vector<32x128xi32>
    %c32_i32 = arith.constant 32 : i32
    %120 = vector.broadcast %c32_i32 : i32 to vector<32x128xi32>
    %121 = arith.cmpi slt, %119, %120 : vector<32x128xi32>
    %cst_75 = arith.constant 0.000000e+00 : f32
    %122 = vector.broadcast %cst_75 : f32 to vector<32x128xf32>
    %123 = arith.select %121, %118, %122 : vector<32x128xi1>, vector<32x128xf32>
    %124 = arith.mulf %123, %123 : vector<32x128xf32>
    %cst_76 = arith.constant dense<0.000000e+00> : vector<32xf32>
    %125 = vector.multi_reduction <add>, %124, %cst_76 [1] : vector<32x128xf32> to vector<32xf32>
    %126 = vector.shape_cast %125 : vector<32xf32> to vector<32x1xf32>
    %cst_77 = arith.constant 1.000000e-24 : f32
    %127 = vector.broadcast %cst_77 : f32 to vector<32x1xf32>
    %128 = arith.maximumf %126, %127 : vector<32x1xf32>
    %129 = math.rsqrt %128 : vector<32x1xf32>
    %130 = vector.broadcast %129 : vector<32x1xf32> to vector<32x128xf32>
    %131 = arith.mulf %123, %130 : vector<32x128xf32>
    %c0_78 = arith.constant 0 : index
    %c0_79 = arith.constant 0 : index
    %132 = memref.load %arg1[%c0_78, %c0_79] : memref<1x1xf32, #tpu.memory_space<smem>>
    %133 = vector.extract_strided_slice %131 {offsets = [0, 0], sizes = [16, 128], strides = [1, 1]} : vector<32x128xf32> to vector<16x128xf32>
    %134 = vector.broadcast %132 : f32 to vector<16x128xf32>
    %135 = arith.mulf %133, %134 : vector<16x128xf32>
    %136 = vector.extract_strided_slice %131 {offsets = [16, 0], sizes = [16, 128], strides = [1, 1]} : vector<32x128xf32> to vector<16x128xf32>
    %cst_80 = arith.constant dense<0.000000e+00> : vector<16x16xf32>
    %137 = tpu.matmul %135, %136, %cst_80 {dimension_numbers = #tpu.dot_dimension_numbers<[1], [1], [0], [0], [0, 0, 1, 0], [], []>} : vector<16x128xf32>, vector<16x128xf32>, vector<16x16xf32> -> vector<16x16xf32>
    %cst_81 = arith.constant dense<0.000000e+00> : vector<16x16xf32>
    %138 = tpu.matmul %136, %135, %cst_81 {dimension_numbers = #tpu.dot_dimension_numbers<[1], [1], [0], [0], [0, 0, 1, 0], [], []>} : vector<16x128xf32>, vector<16x128xf32>, vector<16x16xf32> -> vector<16x16xf32>
    %cst_82 = arith.constant dense<0xFF800000> : vector<16xf32>
    %139 = vector.multi_reduction <maximumf>, %137, %cst_82 [1] : vector<16x16xf32> to vector<16xf32>
    %140 = vector.shape_cast %139 : vector<16xf32> to vector<16x1xf32>
    %141 = vector.broadcast %140 : vector<16x1xf32> to vector<16x16xf32>
    %142 = arith.subf %137, %141 : vector<16x16xf32>
    %143 = math.exp %142 : vector<16x16xf32>
    %cst_83 = arith.constant dense<0.000000e+00> : vector<16xf32>
    %144 = vector.multi_reduction <add>, %143, %cst_83 [1] : vector<16x16xf32> to vector<16xf32>
    %145 = vector.shape_cast %144 : vector<16xf32> to vector<16x1xf32>
    %146 = tpu.reciprocal %145 {approx = true} : vector<16x1xf32> -> vector<16x1xf32>
    %147 = vector.broadcast %146 : vector<16x1xf32> to vector<16x16xf32>
    %148 = arith.mulf %143, %147 : vector<16x16xf32>
    %cst_84 = arith.constant dense<0xFF800000> : vector<16xf32>
    %149 = vector.multi_reduction <maximumf>, %138, %cst_84 [1] : vector<16x16xf32> to vector<16xf32>
    %150 = vector.shape_cast %149 : vector<16xf32> to vector<16x1xf32>
    %151 = vector.broadcast %150 : vector<16x1xf32> to vector<16x16xf32>
    %152 = arith.subf %138, %151 : vector<16x16xf32>
    %153 = math.exp %152 : vector<16x16xf32>
    %cst_85 = arith.constant dense<0.000000e+00> : vector<16xf32>
    %154 = vector.multi_reduction <add>, %153, %cst_85 [1] : vector<16x16xf32> to vector<16xf32>
    %155 = vector.shape_cast %154 : vector<16xf32> to vector<16x1xf32>
    %156 = tpu.reciprocal %155 {approx = true} : vector<16x1xf32> -> vector<16x1xf32>
    %157 = vector.broadcast %156 : vector<16x1xf32> to vector<16x16xf32>
    %158 = arith.mulf %153, %157 : vector<16x16xf32>
    %c15 = arith.constant 15 : index
    %c0_86 = arith.constant 0 : index
    %159 = vector.load %arg3[%c15, %c0_86] : memref<16x128xf32, #tpu.memory_space<vmem>>, vector<1x128xf32>
    %160 = vector.extract_strided_slice %118 {offsets = [0, 32], sizes = [32, 1], strides = [1, 1]} : vector<32x128xf32> to vector<32x1xf32>
    %161 = vector.extract_strided_slice %160 {offsets = [16, 0], sizes = [16, 1], strides = [1, 1]} : vector<32x1xf32> to vector<16x1xf32>
    %162 = vector.broadcast %161 : vector<16x1xf32> to vector<16x128xf32>
    %163 = vector.broadcast %159 : vector<1x128xf32> to vector<16x128xf32>
    %164 = arith.mulf %162, %163 : vector<16x128xf32>
    %cst_87 = arith.constant dense<0.000000e+00> : vector<16x128xf32>
    %165 = tpu.matmul %148, %164, %cst_87 {dimension_numbers = #tpu.dot_dimension_numbers<[1], [0], [0], [1], [0, 0, 1, 1], [], []>} : vector<16x16xf32>, vector<16x128xf32>, vector<16x128xf32> -> vector<16x128xf32>
    %166 = vector.extract_strided_slice %160 {offsets = [0, 0], sizes = [16, 1], strides = [1, 1]} : vector<32x1xf32> to vector<16x1xf32>
    %167 = vector.broadcast %166 : vector<16x1xf32> to vector<16x128xf32>
    %168 = vector.broadcast %159 : vector<1x128xf32> to vector<16x128xf32>
    %169 = arith.mulf %167, %168 : vector<16x128xf32>
    %cst_88 = arith.constant dense<0.000000e+00> : vector<16x128xf32>
    %170 = tpu.matmul %158, %169, %cst_88 {dimension_numbers = #tpu.dot_dimension_numbers<[1], [0], [0], [1], [0, 0, 1, 1], [], []>} : vector<16x16xf32>, vector<16x128xf32>, vector<16x128xf32> -> vector<16x128xf32>
    %171 = arith.truncf %118 : vector<32x128xf32> to vector<32x128xbf16>
    %c12_89 = arith.constant 12 : index
    %c0_90 = arith.constant 0 : index
    %c0_91 = arith.constant 0 : index
    %172 = vector.load %arg2[%c12_89, %c0_90, %c0_91] : memref<14x128x128xbf16, #tpu.memory_space<vmem>>, vector<1x128x128xbf16>
    %173 = vector.shape_cast %172 : vector<1x128x128xbf16> to vector<128x128xbf16>
    %cst_92 = arith.constant dense<0.000000e+00> : vector<32x128xf32>
    %174 = tpu.matmul %171, %173, %cst_92 {dimension_numbers = #tpu.dot_dimension_numbers<[1], [0], [0], [1], [0, 0, 1, 1], [], []>} : vector<32x128xbf16>, vector<128x128xbf16>, vector<32x128xf32> -> vector<32x128xf32>
    %175 = tpu.concatenate %165, %170 in 0 : vector<16x128xf32>, vector<16x128xf32> -> vector<32x128xf32>
    %176 = arith.addf %174, %175 : vector<32x128xf32>
    %c0_93 = arith.constant 0 : index
    %c0_94 = arith.constant 0 : index
    %177 = tpu.strided_load %arg5[%c0_93, %c0_94] {strides = array<i32: 2, 1>} : memref<64x128xf32, #tpu.memory_space<vmem>>, vector<32x128xf32>
    tpu.strided_store %arg5[%c0_93, %c0_94], %176 {strides = array<i32: 2, 1>} : memref<64x128xf32, #tpu.memory_space<vmem>>, vector<32x128xf32>
    %c1_95 = arith.constant 1 : index
    %c0_96 = arith.constant 0 : index
    %178 = tpu.strided_load %arg5[%c1_95, %c0_96] {strides = array<i32: 2, 1>} : memref<64x128xf32, #tpu.memory_space<vmem>>, vector<32x128xf32>
    tpu.strided_store %arg5[%c1_95, %c0_96], %176 {strides = array<i32: 2, 1>} : memref<64x128xf32, #tpu.memory_space<vmem>>, vector<32x128xf32>
    %c0_97 = arith.constant 0 : index
    %c0_98 = arith.constant 0 : index
    %179 = vector.load %arg5[%c0_97, %c0_98] : memref<64x128xf32, #tpu.memory_space<vmem>>, vector<64x128xf32>
    %c13_99 = arith.constant 13 : index
    %c0_100 = arith.constant 0 : index
    %c0_101 = arith.constant 0 : index
    %180 = vector.load %arg2[%c13_99, %c0_100, %c0_101] : memref<14x128x128xbf16, #tpu.memory_space<vmem>>, vector<1x128x128xbf16>
    %181 = vector.shape_cast %180 : vector<1x128x128xbf16> to vector<128x128xbf16>
    %cst_102 = arith.constant dense<0.000000e+00> : vector<64x128xf32>
    %182 = tpu.matmul %38, %181, %cst_102 {dimension_numbers = #tpu.dot_dimension_numbers<[1], [0], [0], [1], [0, 0, 1, 1], [], []>} : vector<64x128xbf16>, vector<128x128xbf16>, vector<64x128xf32> -> vector<64x128xf32>
    %183 = arith.addf %179, %182 : vector<64x128xf32>
    %c14 = arith.constant 14 : index
    %c0_103 = arith.constant 0 : index
    %184 = vector.load %arg3[%c14, %c0_103] : memref<16x128xf32, #tpu.memory_space<vmem>>, vector<1x128xf32>
    %185 = vector.broadcast %184 : vector<1x128xf32> to vector<64x128xf32>
    %186 = arith.addf %183, %185 : vector<64x128xf32>
    %187 = tpu.iota {dimensions = array<i32: 1>} : vector<64x128xi32>
    %c32_i32_104 = arith.constant 32 : i32
    %188 = vector.broadcast %c32_i32_104 : i32 to vector<64x128xi32>
    %189 = arith.cmpi slt, %187, %188 : vector<64x128xi32>
    %cst_105 = arith.constant 0.000000e+00 : f32
    %190 = vector.broadcast %cst_105 : f32 to vector<64x128xf32>
    %191 = arith.select %189, %186, %190 : vector<64x128xi1>, vector<64x128xf32>
    %192 = arith.mulf %191, %191 : vector<64x128xf32>
    %cst_106 = arith.constant dense<0.000000e+00> : vector<64xf32>
    %193 = vector.multi_reduction <add>, %192, %cst_106 [1] : vector<64x128xf32> to vector<64xf32>
    %194 = vector.shape_cast %193 : vector<64xf32> to vector<64x1xf32>
    %cst_107 = arith.constant 1.000000e-24 : f32
    %195 = vector.broadcast %cst_107 : f32 to vector<64x1xf32>
    %196 = arith.maximumf %194, %195 : vector<64x1xf32>
    %197 = math.rsqrt %196 : vector<64x1xf32>
    %198 = vector.broadcast %197 : vector<64x1xf32> to vector<64x128xf32>
    %199 = arith.mulf %191, %198 : vector<64x128xf32>
    %cst_108 = arith.constant 5.000000e-01 : f32
    %200 = vector.broadcast %cst_108 : f32 to vector<64x128xf32>
    %201 = arith.mulf %200, %186 : vector<64x128xf32>
    %202 = math.tanh %201 : vector<64x128xf32>
    %cst_109 = arith.constant 1.000000e+00 : f32
    %203 = vector.broadcast %cst_109 : f32 to vector<64x128xf32>
    %204 = arith.addf %202, %203 : vector<64x128xf32>
    %cst_110 = arith.constant 5.000000e-01 : f32
    %205 = vector.broadcast %cst_110 : f32 to vector<64x128xf32>
    %206 = arith.mulf %205, %204 : vector<64x128xf32>
    %c32_i32_111 = arith.constant 32 : i32
    %207 = vector.broadcast %c32_i32_111 : i32 to vector<64x128xi32>
    %208 = arith.cmpi eq, %187, %207 : vector<64x128xi32>
    %c33_i32 = arith.constant 33 : i32
    %209 = vector.broadcast %c33_i32 : i32 to vector<64x128xi32>
    %210 = arith.cmpi eq, %187, %209 : vector<64x128xi32>
    %211 = arith.ori %208, %210 : vector<64x128xi1>
    %cst_112 = arith.constant 0.000000e+00 : f32
    %212 = vector.broadcast %cst_112 : f32 to vector<64x128xf32>
    %213 = arith.select %211, %206, %212 : vector<64x128xi1>, vector<64x128xf32>
    %214 = arith.select %189, %199, %213 : vector<64x128xi1>, vector<64x128xf32>
    %c0_113 = arith.constant 0 : index
    %c0_114 = arith.constant 0 : index
    %215 = vector.load %arg4[%c0_113, %c0_114] : memref<64x128xf32, #tpu.memory_space<vmem>>, vector<64x128xf32>
    tpu.vector_store %arg4[%c0_113, %c0_114], %214 {strides = array<i32>} : memref<64x128xf32, #tpu.memory_space<vmem>>, vector<64x128xf32>,
    return
  }
}

</mosaic_0001>

<llo_original>
// kernel: kpfcnn_forward.1
$region0: #{kpfcnn_forward.1}
  #allocation0 [shape = 'u32[]', space=smem, size = 0x4, offset = 0x4, fixed_abs, tag = 'smem constant byte address 0x4 - core index']
  #allocation1 [shape = 'u32[144,128]{1,0:T(1,128)}', space=vmem, size = 0x12000, scoped, tag = 'internal scratch']
  #allocation2 [shape = 'f32[64,128]{1,0:T(8,128)}', space=vmem, size = 0x8000, scoped, tag = 'scratch operand']
  #allocation3 [shape = 'f32[1,1]{1,0:T(1,128)S(6)}', space=smem, size = 0x200, scoped, tag = 'scoped memory for kpfcnn_forward.1']
  %s0 = inlined_call_operand.vmem [shape: f32[64,1], index: 0, kind: input, shape index: {}]
  %s1 = inlined_call_operand.<no memory space> [shape: f32[1,1], index: 1, kind: input, shape index: {}]
  %s2 = inlined_call_operand.hbm [shape: bf16[14,128,128], index: 2, kind: input, shape index: {}]
  %s3 = inlined_call_operand.vmem [shape: f32[16,128], index: 3, kind: input, shape index: {}]
  %s4 = inlined_call_operand.vmem [shape: f32[64,128], index: 4, kind: output, shape index: {}]
  %s5 = sld [smem:[#allocation0]]
  $region30: #{kpfcnn_forward.1} parent=0
    _
  %s7 = ssub.s32 1, %s5
  %s8 = scalar_select 0, %s7, %s5
  %9 = sst [smem:[#allocation3]] %s1
  $region1: #{kpfcnn_forward.1} parent=0
    #allocation4 [shape = 'u8[458752]{0}', space=vmem, size = 0x70000, scoped, tag = 'input window, operand 2, single buffered']
    #allocation5 [shape = 's32[1]{0}', space=sflag, size = 0x4, scoped, tag = 'scoped memory for kpfcnn_forward.1']
    %10 = vsyncpa [#allocation5], 0
    // Predicated region
    $region2: #{kpfcnn_forward.1} parent=1 // pred_check
      _
    $region3: #{kpfcnn_forward.1} parent=1 // pred_check_branch
      %12 = sbr.rel (0) target = $region5
    $region4: #{kpfcnn_forward.1} parent=1 // pred_region
      _
    $region5: #{kpfcnn_forward.1} parent=1 // pred_fallthru
      _
    // Predicated region
    $region6: #{kpfcnn_forward.1} parent=1 // pred_check
      _
    $region7: #{kpfcnn_forward.1} parent=1 // pred_check_branch
      %14 = sbr.rel (0) target = $region9
    $region8: #{kpfcnn_forward.1} parent=1 // pred_region
      _
    $region9: #{kpfcnn_forward.1} parent=1 // pred_fallthru
      _
    // Predicated region
    $region10: #{kpfcnn_forward.1} parent=1 // pred_check
      _
    $region11: #{kpfcnn_forward.1} parent=1 // pred_check_branch
      %16 = sbr.rel (0) target = $region13
    $region12: #{kpfcnn_forward.1} parent=1 // pred_region
      %s18 = ssub.s32 14336, 14336
      %19 = vsyncadd [#allocation5], %s18
      %s20 = sshll.u32 [#allocation4], 4
      %s21 = int_to_ptr.vmem [resolvable:$true] %s20
      %26 = dma.hbm_to_vmem [thread:$0]  %s2, 14336, %s21, [#allocation5], 64, 64, 4
    $region13: #{kpfcnn_forward.1} parent=1 // pred_fallthru
      _
    // Predicated region
    $region14: #{kpfcnn_forward.1} parent=1 // pred_check
      _
    $region15: #{kpfcnn_forward.1} parent=1 // pred_check_branch
      %28 = sbr.rel (0) target = $region17
    $region16: #{kpfcnn_forward.1} parent=1 // pred_region
      _
    $region17: #{kpfcnn_forward.1} parent=1 // pred_fallthru
      _
    // Predicated region
    $region18: #{kpfcnn_forward.1} parent=1 // pred_check
      _
    $region19: #{kpfcnn_forward.1} parent=1 // pred_check_branch
      %30 = sbr.rel (0) target = $region21
    $region20: #{kpfcnn_forward.1} parent=1 // pred_region
      %31 = dma.done [#allocation5], 14336
    $region21: #{kpfcnn_forward.1} parent=1 // pred_fallthru
      _
    %v33 = vld [vmem:[%s0] sm:$0xff]
    %v34 = vld [vmem:[%s0 + $0x8] sm:$0xff]
    %v35 = vld [vmem:[%s0 + $0x10] sm:$0xff]
    %v36 = vld [vmem:[%s0 + $0x18] sm:$0xff]
    %v37 = vld [vmem:[%s0 + $0x20] sm:$0xff]
    %v38 = vld [vmem:[%s0 + $0x28] sm:$0xff]
    %v39 = vld [vmem:[%s0 + $0x30] sm:$0xff]
    %v40 = vld [vmem:[%s0 + $0x38] sm:$0xff]
    %v41 = vld [vmem:[%s3] sm:$0x1]
    %43 = vset.pattern.permute.xlu0 0
    %44 = vperm.xlu0 %43, %v33
    %v45 = vpop.permute.xlu0 %44
    %48 = vset.pattern.permute.xlu0 0
    %49 = vperm.xlu0 %48, %v34
    %v50 = vpop.permute.xlu0 %49
    %53 = vset.pattern.permute.xlu0 0
    %54 = vperm.xlu0 %53, %v35
    %v55 = vpop.permute.xlu0 %54
    %58 = vset.pattern.permute.xlu0 0
    %59 = vperm.xlu0 %58, %v36
    %v60 = vpop.permute.xlu0 %59
    %63 = vset.pattern.permute.xlu0 0
    %64 = vperm.xlu0 %63, %v37
    %v65 = vpop.permute.xlu0 %64
    %68 = vset.pattern.permute.xlu0 0
    %69 = vperm.xlu0 %68, %v38
    %v70 = vpop.permute.xlu0 %69
    %73 = vset.pattern.permute.xlu0 0
    %74 = vperm.xlu0 %73, %v39
    %v75 = vpop.permute.xlu0 %74
    %78 = vset.pattern.permute.xlu0 0
    %79 = vperm.xlu0 %78, %v40
    %v80 = vpop.permute.xlu0 %79
    %v82 = vlaneseq
    %v83 = vshrl.u32 %v82, 7
    %v84 = vsub.s32 0, %v83
    %v85 = vrot.slane %v41, %v84
    %v86 = vmul.f32 %v45, %v85
    %v87 = vmul.f32 %v50, %v85
    %v88 = vmul.f32 %v55, %v85
    %v89 = vmul.f32 %v60, %v85
    %v90 = vmul.f32 %v65, %v85
    %v91 = vmul.f32 %v70, %v85
    %v92 = vmul.f32 %v75, %v85
    %v93 = vmul.f32 %v80, %v85
    %v94 = vld [vmem:[%s3 + $0x1] sm:$0x1]
    %v95 = vlaneseq
    %v96 = vshrl.u32 %v95, 7
    %v97 = vsub.s32 0, %v96
    %v98 = vrot.slane %v94, %v97
    %v99 = vadd.f32 %v86, %v98
    %v100 = vadd.f32 %v87, %v98
    %v101 = vadd.f32 %v88, %v98
    %v102 = vadd.f32 %v89, %v98
    %v103 = vadd.f32 %v90, %v98
    %v104 = vadd.f32 %v91, %v98
    %v105 = vadd.f32 %v92, %v98
    %v106 = vadd.f32 %v93, %v98
    %v107 = vmul.f32 %v99, 0.1
    %v108 = vmul.f32 %v100, 0.1
    %v109 = vmul.f32 %v101, 0.1
    %v110 = vmul.f32 %v102, 0.1
    %v111 = vmul.f32 %v103, 0.1
    %v112 = vmul.f32 %v104, 0.1
    %v113 = vmul.f32 %v105, 0.1
    %v114 = vmul.f32 %v106, 0.1
    %v115 = vmax.f32 %v99, %v107
    %v116 = vmax.f32 %v100, %v108
    %v117 = vmax.f32 %v101, %v109
    %v118 = vmax.f32 %v102, %v110
    %v119 = vmax.f32 %v103, %v111
    %v120 = vmax.f32 %v104, %v112
    %v121 = vmax.f32 %v105, %v113
    %v122 = vmax.f32 %v106, %v114
    %v123 = vpack.c.bf16 %v116, %v115
    %v124 = vpack.c.bf16 %v118, %v117
    %v125 = vpack.c.bf16 %v120, %v119
    %v126 = vpack.c.bf16 %v122, %v121
    %v127 = vld [vmem:[#allocation4] sm:$0xf]
    %v128 = vld [vmem:[#allocation4 + $0x4] sm:$0xf]
    %v129 = vld [vmem:[#allocation4 + $0x8] sm:$0xf]
    %v130 = vld [vmem:[#allocation4 + $0xc] sm:$0xf]
    %v131 = vld [vmem:[#allocation4 + $0x10] sm:$0xf]
    %v132 = vld [vmem:[#allocation4 + $0x14] sm:$0xf]
    %v133 = vld [vmem:[#allocation4 + $0x18] sm:$0xf]
    %v134 = vld [vmem:[#allocation4 + $0x1c] sm:$0xf]
    %v135 = vld [vmem:[#allocation4 + $0x20] sm:$0xf]
    %v136 = vld [vmem:[#allocation4 + $0x24] sm:$0xf]
    %v137 = vld [vmem:[#allocation4 + $0x28] sm:$0xf]
    %v138 = vld [vmem:[#allocation4 + $0x2c] sm:$0xf]
    %v139 = vld [vmem:[#allocation4 + $0x30] sm:$0xf]
    %v140 = vld [vmem:[#allocation4 + $0x34] sm:$0xf]
    %v141 = vld [vmem:[#allocation4 + $0x38] sm:$0xf]
    %v142 = vld [vmem:[#allocation4 + $0x3c] sm:$0xf]
    %v143 = vld [vmem:[%s3 + $0x2] sm:$0x1]
    %v144 = vlaneseq
    %v145 = vshrl.u32 %v144, 7
    %v146 = vsub.s32 0, %v145
    %v147 = vrot.slane %v143, %v146
    %v164 = vunpack.c.l.b16 %v127
    %v165 = vunpack.c.l.b16 %v128
    %v166 = vunpack.c.l.b16 %v129
    %v167 = vunpack.c.l.b16 %v130
    %v168 = vunpack.c.l.b16 %v131
    %v169 = vunpack.c.l.b16 %v132
    %v170 = vunpack.c.l.b16 %v133
    %v171 = vunpack.c.l.b16 %v134
    %v172 = vunpack.c.l.b16 %v135
    %v173 = vunpack.c.l.b16 %v136
    %v174 = vunpack.c.l.b16 %v137
    %v175 = vunpack.c.l.b16 %v138
    %v176 = vunpack.c.l.b16 %v139
    %v177 = vunpack.c.l.b16 %v140
    %v178 = vunpack.c.l.b16 %v141
    %v179 = vunpack.c.l.b16 %v142
    %v180 = vpack.c.b16 %v165, %v164
    %v181 = vpack.c.b16 %v167, %v166
    %v182 = vpack.c.b16 %v169, %v168
    %v183 = vpack.c.b16 %v171, %v170
    %v184 = vpack.c.b16 %v173, %v172
    %v185 = vpack.c.b16 %v175, %v174
    %v186 = vpack.c.b16 %v177, %v176
    %v187 = vpack.c.b16 %v179, %v178
    %196 = vmatprep.subr.bf16.mxu0 0
    %197 = vmatpush1.bf16.msra.mxu0 %v180
    %198 = vmatprep.subr.bf16.mxu0 0
    %199 = vmatpush1.bf16.msra.mxu0 %v181
    %200 = vmatprep.subr.bf16.mxu0 0
    %201 = vmatpush1.bf16.msra.mxu0 %v182
    %202 = vmatprep.subr.bf16.mxu0 0
    %203 = vmatpush1.bf16.msra.mxu0 %v183
    %204 = vmatprep.subr.bf16.mxu0 0
    %205 = vmatpush1.bf16.msra.mxu0 %v184
    %206 = vmatprep.subr.bf16.mxu0 0
    %207 = vmatpush1.bf16.msra.mxu0 %v185
    %208 = vmatprep.subr.bf16.mxu0 0
    %209 = vmatpush1.bf16.msra.mxu0 %v186
    %210 = vmatprep.subr.bf16.mxu0 0
    %211 = vmatpush1.bf16.msra.mxu0 %v187
    %212 = vmatprep.subr.bf16.mxu0 0
    %213 = vmatpush1.bf16.msra.mxu0 0
    %214 = vmatprep.subr.bf16.mxu0 0
    %215 = vmatpush1.bf16.msra.mxu0 0
    %216 = vmatprep.subr.bf16.mxu0 0
    %217 = vmatpush1.bf16.msra.mxu0 0
    %218 = vmatprep.subr.bf16.mxu0 0
    %219 = vmatpush1.bf16.msra.mxu0 0
    %220 = vmatprep.subr.bf16.mxu0 0
    %221 = vmatpush1.bf16.msra.mxu0 0
    %222 = vmatprep.subr.bf16.mxu0 0
    %223 = vmatpush1.bf16.msra.mxu0 0
    %224 = vmatprep.subr.bf16.mxu0 0
    %225 = vmatpush1.bf16.msra.mxu0 0
    %226 = vmatprep.subr.bf16.mxu0 0
    %227 = vmatpush1.bf16.msra.mxu0 0
    %228 = vmatprep.mubr.bf16.mxu0 0
    %229 = vmatmul.mubr.bf16.gmra.mrb[0].mxu0 %v123
    %v230 = vpop.f32.mrb[0].mxu0
    %v231 = vadd.f32 %v147, %v230
    %v232 = vpop.f32.mrb[0].mxu0
    %v233 = vpop.f32.mrb[0].mxu0
    %v234 = vadd.f32 %v147, %v233
    %v235 = vpop.f32.mrb[0].mxu0
    %236 = vmatprep.mubr.bf16.mxu0 0
    %237 = vmatmul.mubr.bf16.gmra.mrb[0].mxu0 %v124
    %v238 = vpop.f32.mrb[0].mxu0
    %v239 = vadd.f32 %v147, %v238
    %v240 = vpop.f32.mrb[0].mxu0
    %v241 = vpop.f32.mrb[0].mxu0
    %v242 = vadd.f32 %v147, %v241
    %v243 = vpop.f32.mrb[0].mxu0
    %244 = vmatprep.mubr.bf16.mxu0 0
    %245 = vmatmul.mubr.bf16.gmra.mrb[0].mxu0 %v125
    %v246 = vpop.f32.mrb[0].mxu0
    %v247 = vadd.f32 %v147, %v246
    %v248 = vpop.f32.mrb[0].mxu0
    %v249 = vpop.f32.mrb[0].mxu0
    %v250 = vadd.f32 %v147, %v249
    %v251 = vpop.f32.mrb[0].mxu0
    %252 = vmatprep.mubr.bf16.mxu0 0
    %253 = vmatmul.mubr.bf16.gmra.mrb[0].mxu0 %v126
    %v254 = vpop.f32.mrb[0].mxu0
    %v255 = vadd.f32 %v147, %v254
    %v256 = vpop.f32.mrb[0].mxu0
    %v257 = vpop.f32.mrb[0].mxu0
    %v258 = vadd.f32 %v147, %v257
    %v259 = vpop.f32.mrb[0].mxu0
    %260 = vdwg.mxu0
    %v261 = vmul.f32 %v231, 0.1
    %v262 = vmul.f32 %v234, 0.1
    %v263 = vmul.f32 %v239, 0.1
    %v264 = vmul.f32 %v242, 0.1
    %v265 = vmul.f32 %v247, 0.1
    %v266 = vmul.f32 %v250, 0.1
    %v267 = vmul.f32 %v255, 0.1
    %v268 = vmul.f32 %v258, 0.1
    %v269 = vmax.f32 %v231, %v261
    %v270 = vmax.f32 %v234, %v262
    %v271 = vmax.f32 %v239, %v263
    %v272 = vmax.f32 %v242, %v264
    %v273 = vmax.f32 %v247, %v265
    %v274 = vmax.f32 %v250, %v266
    %v275 = vmax.f32 %v255, %v267
    %v276 = vmax.f32 %v258, %v268
    %v277 = vpack.c.bf16 %v270, %v269
    %v278 = vpack.c.bf16 %v272, %v271
    %v279 = vpack.c.bf16 %v274, %v273
    %v280 = vpack.c.bf16 %v276, %v275
    %s281 = scalar_lea.vmem [#allocation4], 64
    %v282 = vld [vmem:[%s281] sm:$0xf]
    %v283 = vld [vmem:[%s281 + $0x4] sm:$0xf]
    %v284 = vld [vmem:[%s281 + $0x8] sm:$0xf]
    %v285 = vld [vmem:[%s281 + $0xc] sm:$0xf]
    %v286 = vld [vmem:[%s281 + $0x10] sm:$0xf]
    %v287 = vld [vmem:[%s281 + $0x14] sm:$0xf]
    %v288 = vld [vmem:[%s281 + $0x18] sm:$0xf]
    %v289 = vld [vmem:[%s281 + $0x1c] sm:$0xf]
    %v290 = vld [vmem:[%s281 + $0x20] sm:$0xf]
    %v291 = vld [vmem:[%s281 + $0x24] sm:$0xf]
    %v292 = vld [vmem:[%s281 + $0x28] sm:$0xf]
    %v293 = vld [vmem:[%s281 + $0x2c] sm:$0xf]
    %v294 = vld [vmem:[%s281 + $0x30] sm:$0xf]
    %v295 = vld [vmem:[%s281 + $0x34] sm:$0xf]
    %v296 = vld [vmem:[%s281 + $0x38] sm:$0xf]
    %v297 = vld [vmem:[%s281 + $0x3c] sm:$0xf]
    %v298 = vld [vmem:[%s3 + $0x3] sm:$0x1]
    %v299 = vlaneseq
    %v300 = vshrl.u32 %v299, 7
    %v301 = vsub.s32 0, %v300
    %v302 = vrot.slane %v298, %v301
    %v319 = vunpack.c.l.b16 %v282
    %v320 = vunpack.c.l.b16 %v283
    %v321 = vunpack.c.l.b16 %v284
    %v322 = vunpack.c.l.b16 %v285
    %v323 = vunpack.c.l.b16 %v286
    %v324 = vunpack.c.l.b16 %v287
    %v325 = vunpack.c.l.b16 %v288
    %v326 = vunpack.c.l.b16 %v289
    %v327 = vunpack.c.l.b16 %v290
    %v328 = vunpack.c.l.b16 %v291
    %v329 = vunpack.c.l.b16 %v292
    %v330 = vunpack.c.l.b16 %v293
    %v331 = vunpack.c.l.b16 %v294
    %v332 = vunpack.c.l.b16 %v295
    %v333 = vunpack.c.l.b16 %v296
    %v334 = vunpack.c.l.b16 %v297
    %v335 = vpack.c.b16 %v320, %v319
    %v336 = vpack.c.b16 %v322, %v321
    %v337 = vpack.c.b16 %v324, %v323
    %v338 = vpack.c.b16 %v326, %v325
    %v339 = vpack.c.b16 %v328, %v327
    %v340 = vpack.c.b16 %v330, %v329
    %v341 = vpack.c.b16 %v332, %v331
    %v342 = vpack.c.b16 %v334, %v333
    %351 = vmatprep.subr.bf16.mxu0 0
    %352 = vmatpush1.bf16.msra.mxu0 %v335
    %353 = vmatprep.subr.bf16.mxu0 0
    %354 = vmatpush1.bf16.msra.mxu0 %v336
    %355 = vmatprep.subr.bf16.mxu0 0
    %356 = vmatpush1.bf16.msra.mxu0 %v337
    %357 = vmatprep.subr.bf16.mxu0 0
    %358 = vmatpush1.bf16.msra.mxu0 %v338
    %359 = vmatprep.subr.bf16.mxu0 0
    %360 = vmatpush1.bf16.msra.mxu0 %v339
    %361 = vmatprep.subr.bf16.mxu0 0
    %362 = vmatpush1.bf16.msra.mxu0 %v340
    %363 = vmatprep.subr.bf16.mxu0 0
    %364 = vmatpush1.bf16.msra.mxu0 %v341
    %365 = vmatprep.subr.bf16.mxu0 0
    %366 = vmatpush1.bf16.msra.mxu0 %v342
    %367 = vmatprep.subr.bf16.mxu0 0
    %368 = vmatpush1.bf16.msra.mxu0 0
    %369 = vmatprep.subr.bf16.mxu0 0
    %370 = vmatpush1.bf16.msra.mxu0 0
    %371 = vmatprep.subr.bf16.mxu0 0
    %372 = vmatpush1.bf16.msra.mxu0 0
    %373 = vmatprep.subr.bf16.mxu0 0
    %374 = vmatpush1.bf16.msra.mxu0 0
    %375 = vmatprep.subr.bf16.mxu0 0
    %376 = vmatpush1.bf16.msra.mxu0 0
    %377 = vmatprep.subr.bf16.mxu0 0
    %378 = vmatpush1.bf16.msra.mxu0 0
    %379 = vmatprep.subr.bf16.mxu0 0
    %380 = vmatpush1.bf16.msra.mxu0 0
    %381 = vmatprep.subr.bf16.mxu0 0
    %382 = vmatpush1.bf16.msra.mxu0 0
    %383 = vmatprep.mubr.bf16.mxu0 0
    %384 = vmatmul.mubr.bf16.gmra.mrb[0].mxu0 %v277
    %v385 = vpop.f32.mrb[0].mxu0
    %v386 = vadd.f32 %v302, %v385
    %v387 = vpop.f32.mrb[0].mxu0
    %v388 = vpop.f32.mrb[0].mxu0
    %v389 = vadd.f32 %v302, %v388
    %v390 = vpop.f32.mrb[0].mxu0
    %391 = vmatprep.mubr.bf16.mxu0 0
    %392 = vmatmul.mubr.bf16.gmra.mrb[0].mxu0 %v278
    %v393 = vpop.f32.mrb[0].mxu0
    %v394 = vadd.f32 %v302, %v393
    %v395 = vpop.f32.mrb[0].mxu0
    %v396 = vpop.f32.mrb[0].mxu0
    %v397 = vadd.f32 %v302, %v396
    %v398 = vpop.f32.mrb[0].mxu0
    %399 = vmatprep.mubr.bf16.mxu0 0
    %400 = vmatmul.mubr.bf16.gmra.mrb[0].mxu0 %v279
    %v401 = vpop.f32.mrb[0].mxu0
    %v402 = vadd.f32 %v302, %v401
    %v403 = vpop.f32.mrb[0].mxu0
    %v404 = vpop.f32.mrb[0].mxu0
    %v405 = vadd.f32 %v302, %v404
    %v406 = vpop.f32.mrb[0].mxu0
    %407 = vmatprep.mubr.bf16.mxu0 0
    %408 = vmatmul.mubr.bf16.gmra.mrb[0].mxu0 %v280
    %v409 = vpop.f32.mrb[0].mxu0
    %v410 = vadd.f32 %v302, %v409
    %v411 = vpop.f32.mrb[0].mxu0
    %v412 = vpop.f32.mrb[0].mxu0
    %v413 = vadd.f32 %v302, %v412
    %v414 = vpop.f32.mrb[0].mxu0
    %415 = vdwg.mxu0
    %s416 = scalar_lea.vmem [#allocation4], 128
    %v417 = vld [vmem:[%s416] sm:$0xf]
    %v418 = vld [vmem:[%s416 + $0x4] sm:$0xf]
    %v419 = vld [vmem:[%s416 + $0x8] sm:$0xf]
    %v420 = vld [vmem:[%s416 + $0xc] sm:$0xf]
    %v421 = vld [vmem:[%s416 + $0x10] sm:$0xf]
    %v422 = vld [vmem:[%s416 + $0x14] sm:$0xf]
    %v423 = vld [vmem:[%s416 + $0x18] sm:$0xf]
    %v424 = vld [vmem:[%s416 + $0x1c] sm:$0xf]
    %v425 = vld [vmem:[%s416 + $0x20] sm:$0xf]
    %v426 = vld [vmem:[%s416 + $0x24] sm:$0xf]
    %v427 = vld [vmem:[%s416 + $0x28] sm:$0xf]
    %v428 = vld [vmem:[%s416 + $0x2c] sm:$0xf]
    %v429 = vld [vmem:[%s416 + $0x30] sm:$0xf]
    %v430 = vld [vmem:[%s416 + $0x34] sm:$0xf]
    %v431 = vld [vmem:[%s416 + $0x38] sm:$0xf]
    %v432 = vld [vmem:[%s416 + $0x3c] sm:$0xf]
    %v449 = vunpack.c.l.b16 %v417
    %v450 = vunpack.c.l.b16 %v418
    %v451 = vunpack.c.l.b16 %v419
    %v452 = vunpack.c.l.b16 %v420
    %v453 = vunpack.c.l.b16 %v421
    %v454 = vunpack.c.l.b16 %v422
    %v455 = vunpack.c.l.b16 %v423
    %v456 = vunpack.c.l.b16 %v424
    %v457 = vunpack.c.l.b16 %v425
    %v458 = vunpack.c.l.b16 %v426
    %v459 = vunpack.c.l.b16 %v427
    %v460 = vunpack.c.l.b16 %v428
    %v461 = vunpack.c.l.b16 %v429
    %v462 = vunpack.c.l.b16 %v430
    %v463 = vunpack.c.l.b16 %v431
    %v464 = vunpack.c.l.b16 %v432
    %v465 = vpack.c.b16 %v450, %v449
    %v466 = vpack.c.b16 %v452, %v451
    %v467 = vpack.c.b16 %v454, %v453
    %v468 = vpack.c.b16 %v456, %v455
    %v469 = vpack.c.b16 %v458, %v457
    %v470 = vpack.c.b16 %v460, %v459
    %v471 = vpack.c.b16 %v462, %v461
    %v472 = vpack.c.b16 %v464, %v463
    %481 = vmatprep.subr.bf16.mxu0 0
    %482 = vmatpush1.bf16.msra.mxu0 %v465
    %483 = vmatprep.subr.bf16.mxu0 0
    %484 = vmatpush1.bf16.msra.mxu0 %v466
    %485 = vmatprep.subr.bf16.mxu0 0
    %486 = vmatpush1.bf16.msra.mxu0 %v467
    %487 = vmatprep.subr.bf16.mxu0 0
    %488 = vmatpush1.bf16.msra.mxu0 %v468
    %489 = vmatprep.subr.bf16.mxu0 0
    %490 = vmatpush1.bf16.msra.mxu0 %v469
    %491 = vmatprep.subr.bf16.mxu0 0
    %492 = vmatpush1.bf16.msra.mxu0 %v470
    %493 = vmatprep.subr.bf16.mxu0 0
    %494 = vmatpush1.bf16.msra.mxu0 %v471
    %495 = vmatprep.subr.bf16.mxu0 0
    %496 = vmatpush1.bf16.msra.mxu0 %v472
    %497 = vmatprep.subr.bf16.mxu0 0
    %498 = vmatpush1.bf16.msra.mxu0 0
    %499 = vmatprep.subr.bf16.mxu0 0
    %500 = vmatpush1.bf16.msra.mxu0 0
    %501 = vmatprep.subr.bf16.mxu0 0
    %502 = vmatpush1.bf16.msra.mxu0 0
    %503 = vmatprep.subr.bf16.mxu0 0
    %504 = vmatpush1.bf16.msra.mxu0 0
    %505 = vmatprep.subr.bf16.mxu0 0
    %506 = vmatpush1.bf16.msra.mxu0 0
    %507 = vmatprep.subr.bf16.mxu0 0
    %508 = vmatpush1.bf16.msra.mxu0 0
    %509 = vmatprep.subr.bf16.mxu0 0
    %510 = vmatpush1.bf16.msra.mxu0 0
    %511 = vmatprep.subr.bf16.mxu0 0
    %512 = vmatpush1.bf16.msra.mxu0 0
    %513 = vmatprep.mubr.bf16.mxu0 0
    %514 = vmatmul.mubr.bf16.gmra.mrb[0].mxu0 %v123
    %v515 = vpop.f32.mrb[0].mxu0
    %v516 = vadd.f32 0.0, %v515
    %v517 = vpop.f32.mrb[0].mxu0
    %v518 = vpop.f32.mrb[0].mxu0
    %v519 = vadd.f32 0.0, %v518
    %v520 = vpop.f32.mrb[0].mxu0
    %521 = vmatprep.mubr.bf16.mxu0 0
    %522 = vmatmul.mubr.bf16.gmra.mrb[0].mxu0 %v124
    %v523 = vpop.f32.mrb[0].mxu0
    %v524 = vadd.f32 0.0, %v523
    %v525 = vpop.f32.mrb[0].mxu0
    %v526 = vpop.f32.mrb[0].mxu0
    %v527 = vadd.f32 0.0, %v526
    %v528 = vpop.f32.mrb[0].mxu0
    %529 = vmatprep.mubr.bf16.mxu0 0
    %530 = vmatmul.mubr.bf16.gmra.mrb[0].mxu0 %v125
    %v531 = vpop.f32.mrb[0].mxu0
    %v532 = vadd.f32 0.0, %v531
    %v533 = vpop.f32.mrb[0].mxu0
    %v534 = vpop.f32.mrb[0].mxu0
    %v535 = vadd.f32 0.0, %v534
    %v536 = vpop.f32.mrb[0].mxu0
    %537 = vmatprep.mubr.bf16.mxu0 0
    %538 = vmatmul.mubr.bf16.gmra.mrb[0].mxu0 %v126
    %v539 = vpop.f32.mrb[0].mxu0
    %v540 = vadd.f32 0.0, %v539
    %v541 = vpop.f32.mrb[0].mxu0
    %v542 = vpop.f32.mrb[0].mxu0
    %v543 = vadd.f32 0.0, %v542
    %v544 = vpop.f32.mrb[0].mxu0
    %545 = vdwg.mxu0
    %v546 = vadd.f32 %v386, %v516
    %v547 = vadd.f32 %v389, %v519
    %v548 = vadd.f32 %v394, %v524
    %v549 = vadd.f32 %v397, %v527
    %v550 = vadd.f32 %v402, %v532
    %v551 = vadd.f32 %v405, %v535
    %v552 = vadd.f32 %v410, %v540
    %v553 = vadd.f32 %v413, %v543
    %v554 = vld [vmem:[%s3 + $0x4] sm:$0x1]
    %v555 = vlaneseq
    %v556 = vshrl.u32 %v555, 7
    %v557 = vsub.s32 0, %v556
    %v558 = vrot.slane %v554, %v557
    %v559 = vadd.f32 %v546, %v558
    %v560 = vadd.f32 %v547, %v558
    %v561 = vadd.f32 %v548, %v558
    %v562 = vadd.f32 %v549, %v558
    %v563 = vadd.f32 %v550, %v558
    %v564 = vadd.f32 %v551, %v558
    %v565 = vadd.f32 %v552, %v558
    %v566 = vadd.f32 %v553, %v558
    %v567 = vmul.f32 %v559, 0.1
    %v568 = vmul.f32 %v560, 0.1
    %v569 = vmul.f32 %v561, 0.1
    %v570 = vmul.f32 %v562, 0.1
    %v571 = vmul.f32 %v563, 0.1
    %v572 = vmul.f32 %v564, 0.1
    %v573 = vmul.f32 %v565, 0.1
    %v574 = vmul.f32 %v566, 0.1
    %v575 = vmax.f32 %v559, %v567
    %v576 = vmax.f32 %v560, %v568
    %v577 = vmax.f32 %v561, %v569
    %v578 = vmax.f32 %v562, %v570
    %v579 = vmax.f32 %v563, %v571
    %v580 = vmax.f32 %v564, %v572
    %v581 = vmax.f32 %v565, %v573
    %v582 = vmax.f32 %v566, %v574
    %v583 = vpack.c.bf16 %v576, %v575
    %v584 = vpack.c.bf16 %v578, %v577
    %v585 = vpack.c.bf16 %v580, %v579
    %v586 = vpack.c.bf16 %v582, %v581
    %s587 = scalar_lea.vmem [#allocation4], 192
    %v588 = vld [vmem:[%s587] sm:$0xf]
    %v589 = vld [vmem:[%s587 + $0x4] sm:$0xf]
    %v590 = vld [vmem:[%s587 + $0x8] sm:$0xf]
    %v591 = vld [vmem:[%s587 + $0xc] sm:$0xf]
    %v592 = vld [vmem:[%s587 + $0x10] sm:$0xf]
    %v593 = vld [vmem:[%s587 + $0x14] sm:$0xf]
    %v594 = vld [vmem:[%s587 + $0x18] sm:$0xf]
    %v595 = vld [vmem:[%s587 + $0x1c] sm:$0xf]
    %v596 = vld [vmem:[%s587 + $0x20] sm:$0xf]
    %v597 = vld [vmem:[%s587 + $0x24] sm:$0xf]
    %v598 = vld [vmem:[%s587 + $0x28] sm:$0xf]
    %v599 = vld [vmem:[%s587 + $0x2c] sm:$0xf]
    %v600 = vld [vmem:[%s587 + $0x30] sm:$0xf]
    %v601 = vld [vmem:[%s587 + $0x34] sm:$0xf]
    %v602 = vld [vmem:[%s587 + $0x38] sm:$0xf]
    %v603 = vld [vmem:[%s587 + $0x3c] sm:$0xf]
    %v604 = vld [vmem:[%s3 + $0x5] sm:$0x1]
    %v605 = vlaneseq
    %v606 = vshrl.u32 %v605, 7
    %v607 = vsub.s32 0, %v606
    %v608 = vrot.slane %v604, %v607
    %v625 = vunpack.c.l.b16 %v588
    %v626 = vunpack.c.l.b16 %v589
    %v627 = vunpack.c.l.b16 %v590
    %v628 = vunpack.c.l.b16 %v591
    %v629 = vunpack.c.l.b16 %v592
    %v630 = vunpack.c.l.b16 %v593
    %v631 = vunpack.c.l.b16 %v594
    %v632 = vunpack.c.l.b16 %v595
    %v633 = vunpack.c.l.b16 %v596
    %v634 = vunpack.c.l.b16 %v597
    %v635 = vunpack.c.l.b16 %v598
    %v636 = vunpack.c.l.b16 %v599
    %v637 = vunpack.c.l.b16 %v600
    %v638 = vunpack.c.l.b16 %v601
    %v639 = vunpack.c.l.b16 %v602
    %v640 = vunpack.c.l.b16 %v603
    %v641 = vpack.c.b16 %v626, %v625
    %v642 = vpack.c.b16 %v628, %v627
    %v643 = vpack.c.b16 %v630, %v629
    %v644 = vpack.c.b16 %v632, %v631
    %v645 = vpack.c.b16 %v634, %v633
    %v646 = vpack.c.b16 %v636, %v635
    %v647 = vpack.c.b16 %v638, %v637
    %v648 = vpack.c.b16 %v640, %v639
    %657 = vmatprep.subr.bf16.mxu0 0
    %658 = vmatpush1.bf16.msra.mxu0 %v641
    %659 = vmatprep.subr.bf16.mxu0 0
    %660 = vmatpush1.bf16.msra.mxu0 %v642
    %661 = vmatprep.subr.bf16.mxu0 0
    %662 = vmatpush1.bf16.msra.mxu0 %v643
    %663 = vmatprep.subr.bf16.mxu0 0
    %664 = vmatpush1.bf16.msra.mxu0 %v644
    %665 = vmatprep.subr.bf16.mxu0 0
    %666 = vmatpush1.bf16.msra.mxu0 %v645
    %667 = vmatprep.subr.bf16.mxu0 0
    %668 = vmatpush1.bf16.msra.mxu0 %v646
    %669 = vmatprep.subr.bf16.mxu0 0
    %670 = vmatpush1.bf16.msra.mxu0 %v647
    %671 = vmatprep.subr.bf16.mxu0 0
    %672 = vmatpush1.bf16.msra.mxu0 %v648
    %673 = vmatprep.subr.bf16.mxu0 0
    %674 = vmatpush1.bf16.msra.mxu0 0
    %675 = vmatprep.subr.bf16.mxu0 0
    %676 = vmatpush1.bf16.msra.mxu0 0
    %677 = vmatprep.subr.bf16.mxu0 0
    %678 = vmatpush1.bf16.msra.mxu0 0
    %679 = vmatprep.subr.bf16.mxu0 0
    %680 = vmatpush1.bf16.msra.mxu0 0
    %681 = vmatprep.subr.bf16.mxu0 0
    %682 = vmatpush1.bf16.msra.mxu0 0
    %683 = vmatprep.subr.bf16.mxu0 0
    %684 = vmatpush1.bf16.msra.mxu0 0
    %685 = vmatprep.subr.bf16.mxu0 0
    %686 = vmatpush1.bf16.msra.mxu0 0
    %687 = vmatprep.subr.bf16.mxu0 0
    %688 = vmatpush1.bf16.msra.mxu0 0
    %689 = vmatprep.mubr.bf16.mxu0 0
    %690 = vmatmul.mubr.bf16.gmra.mrb[0].mxu0 %v583
    %v691 = vpop.f32.mrb[0].mxu0
    %v692 = vadd.f32 %v608, %v691
    %v693 = vpop.f32.mrb[0].mxu0
    %v694 = vpop.f32.mrb[0].mxu0
    %v695 = vadd.f32 %v608, %v694
    %v696 = vpop.f32.mrb[0].mxu0
    %697 = vmatprep.mubr.bf16.mxu0 0
    %698 = vmatmul.mubr.bf16.gmra.mrb[0].mxu0 %v584
    %v699 = vpop.f32.mrb[0].mxu0
    %v700 = vadd.f32 %v608, %v699
    %v701 = vpop.f32.mrb[0].mxu0
    %v702 = vpop.f32.mrb[0].mxu0
    %v703 = vadd.f32 %v608, %v702
    %v704 = vpop.f32.mrb[0].mxu0
    %705 = vmatprep.mubr.bf16.mxu0 0
    %706 = vmatmul.mubr.bf16.gmra.mrb[0].mxu0 %v585
    %v707 = vpop.f32.mrb[0].mxu0
    %v708 = vadd.f32 %v608, %v707
    %v709 = vpop.f32.mrb[0].mxu0
    %v710 = vpop.f32.mrb[0].mxu0
    %v711 = vadd.f32 %v608, %v710
    %v712 = vpop.f32.mrb[0].mxu0
    %713 = vmatprep.mubr.bf16.mxu0 0
    %714 = vmatmul.mubr.bf16.gmra.mrb[0].mxu0 %v586
    %v715 = vpop.f32.mrb[0].mxu0
    %v716 = vadd.f32 %v608, %v715
    %v717 = vpop.f32.mrb[0].mxu0
    %v718 = vpop.f32.mrb[0].mxu0
    %v719 = vadd.f32 %v608, %v718
    %v720 = vpop.f32.mrb[0].mxu0
    %721 = vdwg.mxu0
    %v722 = vmul.f32 %v692, 0.1
    %v723 = vmul.f32 %v695, 0.1
    %v724 = vmul.f32 %v700, 0.1
    %v725 = vmul.f32 %v703, 0.1
    %v726 = vmul.f32 %v708, 0.1
    %v727 = vmul.f32 %v711, 0.1
    %v728 = vmul.f32 %v716, 0.1
    %v729 = vmul.f32 %v719, 0.1
    %v730 = vmax.f32 %v692, %v722
    %v731 = vmax.f32 %v695, %v723
    %v732 = vmax.f32 %v700, %v724
    %v733 = vmax.f32 %v703, %v725
    %v734 = vmax.f32 %v708, %v726
    %v735 = vmax.f32 %v711, %v727
    %v736 = vmax.f32 %v716, %v728
    %v737 = vmax.f32 %v719, %v729
    %v738 = vpack.c.bf16 %v731, %v730
    %v739 = vpack.c.bf16 %v733, %v732
    %v740 = vpack.c.bf16 %v735, %v734
    %v741 = vpack.c.bf16 %v737, %v736
    %s742 = scalar_lea.vmem [#allocation4], 256
    %v743 = vld [vmem:[%s742] sm:$0xf]
    %v744 = vld [vmem:[%s742 + $0x4] sm:$0xf]
    %v745 = vld [vmem:[%s742 + $0x8] sm:$0xf]
    %v746 = vld [vmem:[%s742 + $0xc] sm:$0xf]
    %v747 = vld [vmem:[%s742 + $0x10] sm:$0xf]
    %v748 = vld [vmem:[%s742 + $0x14] sm:$0xf]
    %v749 = vld [vmem:[%s742 + $0x18] sm:$0xf]
    %v750 = vld [vmem:[%s742 + $0x1c] sm:$0xf]
    %v751 = vld [vmem:[%s742 + $0x20] sm:$0xf]
    %v752 = vld [vmem:[%s742 + $0x24] sm:$0xf]
    %v753 = vld [vmem:[%s742 + $0x28] sm:$0xf]
    %v754 = vld [vmem:[%s742 + $0x2c] sm:$0xf]
    %v755 = vld [vmem:[%s742 + $0x30] sm:$0xf]
    %v756 = vld [vmem:[%s742 + $0x34] sm:$0xf]
    %v757 = vld [vmem:[%s742 + $0x38] sm:$0xf]
    %v758 = vld [vmem:[%s742 + $0x3c] sm:$0xf]
    %v759 = vld [vmem:[%s3 + $0x6] sm:$0x1]
    %v760 = vlaneseq
    %v761 = vshrl.u32 %v760, 7
    %v762 = vsub.s32 0, %v761
    %v763 = vrot.slane %v759, %v762
    %v780 = vunpack.c.l.b16 %v743
    %v781 = vunpack.c.l.b16 %v744
    %v782 = vunpack.c.l.b16 %v745
    %v783 = vunpack.c.l.b16 %v746
    %v784 = vunpack.c.l.b16 %v747
    %v785 = vunpack.c.l.b16 %v748
    %v786 = vunpack.c.l.b16 %v749
    %v787 = vunpack.c.l.b16 %v750
    %v788 = vunpack.c.l.b16 %v751
    %v789 = vunpack.c.l.b16 %v752
    %v790 = vunpack.c.l.b16 %v753
    %v791 = vunpack.c.l.b16 %v754
    %v792 = vunpack.c.l.b16 %v755
    %v793 = vunpack.c.l.b16 %v756
    %v794 = vunpack.c.l.b16 %v757
    %v795 = vunpack.c.l.b16 %v758
    %v796 = vpack.c.b16 %v781, %v780
    %v797 = vpack.c.b16 %v783, %v782
    %v798 = vpack.c.b16 %v785, %v784
    %v799 = vpack.c.b16 %v787, %v786
    %v800 = vpack.c.b16 %v789, %v788
    %v801 = vpack.c.b16 %v791, %v790
    %v802 = vpack.c.b16 %v793, %v792
    %v803 = vpack.c.b16 %v795, %v794
    %812 = vmatprep.subr.bf16.mxu0 0
    %813 = vmatpush1.bf16.msra.mxu0 %v796
    %814 = vmatprep.subr.bf16.mxu0 0
    %815 = vmatpush1.bf16.msra.mxu0 %v797
    %816 = vmatprep.subr.bf16.mxu0 0
    %817 = vmatpush1.bf16.msra.mxu0 %v798
    %818 = vmatprep.subr.bf16.mxu0 0
    %819 = vmatpush1.bf16.msra.mxu0 %v799
    %820 = vmatprep.subr.bf16.mxu0 0
    %821 = vmatpush1.bf16.msra.mxu0 %v800
    %822 = vmatprep.subr.bf16.mxu0 0
    %823 = vmatpush1.bf16.msra.mxu0 %v801
    %824 = vmatprep.subr.bf16.mxu0 0
    %825 = vmatpush1.bf16.msra.mxu0 %v802
    %826 = vmatprep.subr.bf16.mxu0 0
    %827 = vmatpush1.bf16.msra.mxu0 %v803
    %828 = vmatprep.subr.bf16.mxu0 0
    %829 = vmatpush1.bf16.msra.mxu0 0
    %830 = vmatprep.subr.bf16.mxu0 0
    %831 = vmatpush1.bf16.msra.mxu0 0
    %832 = vmatprep.subr.bf16.mxu0 0
    %833 = vmatpush1.bf16.msra.mxu0 0
    %834 = vmatprep.subr.bf16.mxu0 0
    %835 = vmatpush1.bf16.msra.mxu0 0
    %836 = vmatprep.subr.bf16.mxu0 0
    %837 = vmatpush1.bf16.msra.mxu0 0
    %838 = vmatprep.subr.bf16.mxu0 0
    %839 = vmatpush1.bf16.msra.mxu0 0
    %840 = vmatprep.subr.bf16.mxu0 0
    %841 = vmatpush1.bf16.msra.mxu0 0
    %842 = vmatprep.subr.bf16.mxu0 0
    %843 = vmatpush1.bf16.msra.mxu0 0
    %844 = vmatprep.mubr.bf16.mxu0 0
    %845 = vmatmul.mubr.bf16.gmra.mrb[0].mxu0 %v738
    %v846 = vpop.f32.mrb[0].mxu0
    %v847 = vadd.f32 %v763, %v846
    %v848 = vpop.f32.mrb[0].mxu0
    %v849 = vpop.f32.mrb[0].mxu0
    %v850 = vadd.f32 %v763, %v849
    %v851 = vpop.f32.mrb[0].mxu0
    %852 = vmatprep.mubr.bf16.mxu0 0
    %853 = vmatmul.mubr.bf16.gmra.mrb[0].mxu0 %v739
    %v854 = vpop.f32.mrb[0].mxu0
    %v855 = vadd.f32 %v763, %v854
    %v856 = vpop.f32.mrb[0].mxu0
    %v857 = vpop.f32.mrb[0].mxu0
    %v858 = vadd.f32 %v763, %v857
    %v859 = vpop.f32.mrb[0].mxu0
    %860 = vmatprep.mubr.bf16.mxu0 0
    %861 = vmatmul.mubr.bf16.gmra.mrb[0].mxu0 %v740
    %v862 = vpop.f32.mrb[0].mxu0
    %v863 = vadd.f32 %v763, %v862
    %v864 = vpop.f32.mrb[0].mxu0
    %v865 = vpop.f32.mrb[0].mxu0
    %v866 = vadd.f32 %v763, %v865
    %v867 = vpop.f32.mrb[0].mxu0
    %868 = vmatprep.mubr.bf16.mxu0 0
    %869 = vmatmul.mubr.bf16.gmra.mrb[0].mxu0 %v741
    %v870 = vpop.f32.mrb[0].mxu0
    %v871 = vadd.f32 %v763, %v870
    %v872 = vpop.f32.mrb[0].mxu0
    %v873 = vpop.f32.mrb[0].mxu0
    %v874 = vadd.f32 %v763, %v873
    %v875 = vpop.f32.mrb[0].mxu0
    %876 = vdwg.mxu0
    %s877 = scalar_lea.vmem [#allocation4], 320
    %v878 = vld [vmem:[%s877] sm:$0xf]
    %v879 = vld [vmem:[%s877 + $0x4] sm:$0xf]
    %v880 = vld [vmem:[%s877 + $0x8] sm:$0xf]
    %v881 = vld [vmem:[%s877 + $0xc] sm:$0xf]
    %v882 = vld [vmem:[%s877 + $0x10] sm:$0xf]
    %v883 = vld [vmem:[%s877 + $0x14] sm:$0xf]
    %v884 = vld [vmem:[%s877 + $0x18] sm:$0xf]
    %v885 = vld [vmem:[%s877 + $0x1c] sm:$0xf]
    %v886 = vld [vmem:[%s877 + $0x20] sm:$0xf]
    %v887 = vld [vmem:[%s877 + $0x24] sm:$0xf]
    %v888 = vld [vmem:[%s877 + $0x28] sm:$0xf]
    %v889 = vld [vmem:[%s877 + $0x2c] sm:$0xf]
    %v890 = vld [vmem:[%s877 + $0x30] sm:$0xf]
    %v891 = vld [vmem:[%s877 + $0x34] sm:$0xf]
    %v892 = vld [vmem:[%s877 + $0x38] sm:$0xf]
    %v893 = vld [vmem:[%s877 + $0x3c] sm:$0xf]
    %v910 = vunpack.c.l.b16 %v878
    %v911 = vunpack.c.l.b16 %v879
    %v912 = vunpack.c.l.b16 %v880
    %v913 = vunpack.c.l.b16 %v881
    %v914 = vunpack.c.l.b16 %v882
    %v915 = vunpack.c.l.b16 %v883
    %v916 = vunpack.c.l.b16 %v884
    %v917 = vunpack.c.l.b16 %v885
    %v918 = vunpack.c.l.b16 %v886
    %v919 = vunpack.c.l.b16 %v887
    %v920 = vunpack.c.l.b16 %v888
    %v921 = vunpack.c.l.b16 %v889
    %v922 = vunpack.c.l.b16 %v890
    %v923 = vunpack.c.l.b16 %v891
    %v924 = vunpack.c.l.b16 %v892
    %v925 = vunpack.c.l.b16 %v893
    %v926 = vpack.c.b16 %v911, %v910
    %v927 = vpack.c.b16 %v913, %v912
    %v928 = vpack.c.b16 %v915, %v914
    %v929 = vpack.c.b16 %v917, %v916
    %v930 = vpack.c.b16 %v919, %v918
    %v931 = vpack.c.b16 %v921, %v920
    %v932 = vpack.c.b16 %v923, %v922
    %v933 = vpack.c.b16 %v925, %v924
    %942 = vmatprep.subr.bf16.mxu0 0
    %943 = vmatpush1.bf16.msra.mxu0 %v926
    %944 = vmatprep.subr.bf16.mxu0 0
    %945 = vmatpush1.bf16.msra.mxu0 %v927
    %946 = vmatprep.subr.bf16.mxu0 0
    %947 = vmatpush1.bf16.msra.mxu0 %v928
    %948 = vmatprep.subr.bf16.mxu0 0
    %949 = vmatpush1.bf16.msra.mxu0 %v929
    %950 = vmatprep.subr.bf16.mxu0 0
    %951 = vmatpush1.bf16.msra.mxu0 %v930
    %952 = vmatprep.subr.bf16.mxu0 0
    %953 = vmatpush1.bf16.msra.mxu0 %v931
    %954 = vmatprep.subr.bf16.mxu0 0
    %955 = vmatpush1.bf16.msra.mxu0 %v932
    %956 = vmatprep.subr.bf16.mxu0 0
    %957 = vmatpush1.bf16.msra.mxu0 %v933
    %958 = vmatprep.subr.bf16.mxu0 0
    %959 = vmatpush1.bf16.msra.mxu0 0
    %960 = vmatprep.subr.bf16.mxu0 0
    %961 = vmatpush1.bf16.msra.mxu0 0
    %962 = vmatprep.subr.bf16.mxu0 0
    %963 = vmatpush1.bf16.msra.mxu0 0
    %964 = vmatprep.subr.bf16.mxu0 0
    %965 = vmatpush1.bf16.msra.mxu0 0
    %966 = vmatprep.subr.bf16.mxu0 0
    %967 = vmatpush1.bf16.msra.mxu0 0
    %968 = vmatprep.subr.bf16.mxu0 0
    %969 = vmatpush1.bf16.msra.mxu0 0
    %970 = vmatprep.subr.bf16.mxu0 0
    %971 = vmatpush1.bf16.msra.mxu0 0
    %972 = vmatprep.subr.bf16.mxu0 0
    %973 = vmatpush1.bf16.msra.mxu0 0
    %974 = vmatprep.mubr.bf16.mxu0 0
    %975 = vmatmul.mubr.bf16.gmra.mrb[0].mxu0 %v583
    %v976 = vpop.f32.mrb[0].mxu0
    %v977 = vadd.f32 0.0, %v976
    %v978 = vpop.f32.mrb[0].mxu0
    %v979 = vpop.f32.mrb[0].mxu0
    %v980 = vadd.f32 0.0, %v979
    %v981 = vpop.f32.mrb[0].mxu0
    %982 = vmatprep.mubr.bf16.mxu0 0
    %983 = vmatmul.mubr.bf16.gmra.mrb[0].mxu0 %v584
    %v984 = vpop.f32.mrb[0].mxu0
    %v985 = vadd.f32 0.0, %v984
    %v986 = vpop.f32.mrb[0].mxu0
    %v987 = vpop.f32.mrb[0].mxu0
    %v988 = vadd.f32 0.0, %v987
    %v989 = vpop.f32.mrb[0].mxu0
    %990 = vmatprep.mubr.bf16.mxu0 0
    %991 = vmatmul.mubr.bf16.gmra.mrb[0].mxu0 %v585
    %v992 = vpop.f32.mrb[0].mxu0
    %v993 = vadd.f32 0.0, %v992
    %v994 = vpop.f32.mrb[0].mxu0
    %v995 = vpop.f32.mrb[0].mxu0
    %v996 = vadd.f32 0.0, %v995
    %v997 = vpop.f32.mrb[0].mxu0
    %998 = vmatprep.mubr.bf16.mxu0 0
    %999 = vmatmul.mubr.bf16.gmra.mrb[0].mxu0 %v586
    %v1000 = vpop.f32.mrb[0].mxu0
    %v1001 = vadd.f32 0.0, %v1000
    %v1002 = vpop.f32.mrb[0].mxu0
    %v1003 = vpop.f32.mrb[0].mxu0
    %v1004 = vadd.f32 0.0, %v1003
    %v1005 = vpop.f32.mrb[0].mxu0
    %1006 = vdwg.mxu0
    %v1007 = vadd.f32 %v847, %v977
    %v1008 = vadd.f32 %v850, %v980
    %v1009 = vadd.f32 %v855, %v985
    %v1010 = vadd.f32 %v858, %v988
    %v1011 = vadd.f32 %v863, %v993
    %v1012 = vadd.f32 %v866, %v996
    %v1013 = vadd.f32 %v871, %v1001
    %v1014 = vadd.f32 %v874, %v1004
    %v1015 = vld [vmem:[%s3 + $0x7] sm:$0x1]
    %v1016 = vlaneseq
    %v1017 = vshrl.u32 %v1016, 7
    %v1018 = vsub.s32 0, %v1017
    %v1019 = vrot.slane %v1015, %v1018
    %v1020 = vadd.f32 %v1007, %v1019
    %v1021 = vadd.f32 %v1008, %v1019
    %v1022 = vadd.f32 %v1009, %v1019
    %v1023 = vadd.f32 %v1010, %v1019
    %v1024 = vadd.f32 %v1011, %v1019
    %v1025 = vadd.f32 %v1012, %v1019
    %v1026 = vadd.f32 %v1013, %v1019
    %v1027 = vadd.f32 %v1014, %v1019
    %v1028 = vmul.f32 %v1020, 0.1
    %v1029 = vmul.f32 %v1021, 0.1
    %v1030 = vmul.f32 %v1022, 0.1
    %v1031 = vmul.f32 %v1023, 0.1
    %v1032 = vmul.f32 %v1024, 0.1
    %v1033 = vmul.f32 %v1025, 0.1
    %v1034 = vmul.f32 %v1026, 0.1
    %v1035 = vmul.f32 %v1027, 0.1
    %v1036 = vmax.f32 %v1020, %v1028
    %v1037 = vmax.f32 %v1021, %v1029
    %v1038 = vmax.f32 %v1022, %v1030
    %v1039 = vmax.f32 %v1023, %v1031
    %v1040 = vmax.f32 %v1024, %v1032
    %v1041 = vmax.f32 %v1025, %v1033
    %v1042 = vmax.f32 %v1026, %v1034
    %v1043 = vmax.f32 %v1027, %v1035
    %1044 = vst [vmem:[#allocation2] sm:$0xff] %v1036
    %1045 = vst [vmem:[#allocation2 + $0x8] sm:$0xff] %v1037
    %1046 = vst [vmem:[#allocation2 + $0x10] sm:$0xff] %v1038
    %1047 = vst [vmem:[#allocation2 + $0x18] sm:$0xff] %v1039
    %1048 = vst [vmem:[#allocation2 + $0x20] sm:$0xff] %v1040
    %1049 = vst [vmem:[#allocation2 + $0x28] sm:$0xff] %v1041
    %1050 = vst [vmem:[#allocation2 + $0x30] sm:$0xff] %v1042
    %1051 = vst [vmem:[#allocation2 + $0x38] sm:$0xff] %v1043
    %v1052 = vld [vmem:[#allocation2] ss:$2 sm:$0xff]
    %s1053 = scalar_lea.vmem [#allocation2], 16
    %v1054 = vld [vmem:[%s1053] ss:$2 sm:$0xff]
    %s1055 = scalar_lea.vmem [#allocation2], 32
    %v1056 = vld [vmem:[%s1055] ss:$2 sm:$0xff]
    %s1057 = scalar_lea.vmem [#allocation2], 48
    %v1058 = vld [vmem:[%s1057] ss:$2 sm:$0xff]
    %v1059 = vpack.c.bf16 %v1054, %v1052
    %v1060 = vpack.c.bf16 %v1058, %v1056
    %s1061 = scalar_lea.vmem [#allocation4], 384
    %v1062 = vld [vmem:[%s1061] sm:$0xf]
    %v1063 = vld [vmem:[%s1061 + $0x4] sm:$0xf]
    %v1064 = vld [vmem:[%s1061 + $0x8] sm:$0xf]
    %v1065 = vld [vmem:[%s1061 + $0xc] sm:$0xf]
    %v1066 = vld [vmem:[%s1061 + $0x10] sm:$0xf]
    %v1067 = vld [vmem:[%s1061 + $0x14] sm:$0xf]
    %v1068 = vld [vmem:[%s1061 + $0x18] sm:$0xf]
    %v1069 = vld [vmem:[%s1061 + $0x1c] sm:$0xf]
    %v1070 = vld [vmem:[%s1061 + $0x20] sm:$0xf]
    %v1071 = vld [vmem:[%s1061 + $0x24] sm:$0xf]
    %v1072 = vld [vmem:[%s1061 + $0x28] sm:$0xf]
    %v1073 = vld [vmem:[%s1061 + $0x2c] sm:$0xf]
    %v1074 = vld [vmem:[%s1061 + $0x30] sm:$0xf]
    %v1075 = vld [vmem:[%s1061 + $0x34] sm:$0xf]
    %v1076 = vld [vmem:[%s1061 + $0x38] sm:$0xf]
    %v1077 = vld [vmem:[%s1061 + $0x3c] sm:$0xf]
    %v1078 = vld [vmem:[%s3 + $0x8] sm:$0x1]
    %v1079 = vlaneseq
    %v1080 = vshrl.u32 %v1079, 7
    %v1081 = vsub.s32 0, %v1080
    %v1082 = vrot.slane %v1078, %v1081
    %v1099 = vunpack.c.l.b16 %v1062
    %v1100 = vunpack.c.l.b16 %v1063
    %v1101 = vunpack.c.l.b16 %v1064
    %v1102 = vunpack.c.l.b16 %v1065
    %v1103 = vunpack.c.l.b16 %v1066
    %v1104 = vunpack.c.l.b16 %v1067
    %v1105 = vunpack.c.l.b16 %v1068
    %v1106 = vunpack.c.l.b16 %v1069
    %v1107 = vunpack.c.l.b16 %v1070
    %v1108 = vunpack.c.l.b16 %v1071
    %v1109 = vunpack.c.l.b16 %v1072
    %v1110 = vunpack.c.l.b16 %v1073
    %v1111 = vunpack.c.l.b16 %v1074
    %v1112 = vunpack.c.l.b16 %v1075
    %v1113 = vunpack.c.l.b16 %v1076
    %v1114 = vunpack.c.l.b16 %v1077
    %v1115 = vpack.c.b16 %v1100, %v1099
    %v1116 = vpack.c.b16 %v1102, %v1101
    %v1117 = vpack.c.b16 %v1104, %v1103
    %v1118 = vpack.c.b16 %v1106, %v1105
    %v1119 = vpack.c.b16 %v1108, %v1107
    %v1120 = vpack.c.b16 %v1110, %v1109
    %v1121 = vpack.c.b16 %v1112, %v1111
    %v1122 = vpack.c.b16 %v1114, %v1113
    %1131 = vmatprep.subr.bf16.mxu0 0
    %1132 = vmatpush1.bf16.msra.mxu0 %v1115
    %1133 = vmatprep.subr.bf16.mxu0 0
    %1134 = vmatpush1.bf16.msra.mxu0 %v1116
    %1135 = vmatprep.subr.bf16.mxu0 0
    %1136 = vmatpush1.bf16.msra.mxu0 %v1117
    %1137 = vmatprep.subr.bf16.mxu0 0
    %1138 = vmatpush1.bf16.msra.mxu0 %v1118
    %1139 = vmatprep.subr.bf16.mxu0 0
    %1140 = vmatpush1.bf16.msra.mxu0 %v1119
    %1141 = vmatprep.subr.bf16.mxu0 0
    %1142 = vmatpush1.bf16.msra.mxu0 %v1120
    %1143 = vmatprep.subr.bf16.mxu0 0
    %1144 = vmatpush1.bf16.msra.mxu0 %v1121
    %1145 = vmatprep.subr.bf16.mxu0 0
    %1146 = vmatpush1.bf16.msra.mxu0 %v1122
    %1147 = vmatprep.subr.bf16.mxu0 0
    %1148 = vmatpush1.bf16.msra.mxu0 0
    %1149 = vmatprep.subr.bf16.mxu0 0
    %1150 = vmatpush1.bf16.msra.mxu0 0
    %1151 = vmatprep.subr.bf16.mxu0 0
    %1152 = vmatpush1.bf16.msra.mxu0 0
    %1153 = vmatprep.subr.bf16.mxu0 0
    %1154 = vmatpush1.bf16.msra.mxu0 0
    %1155 = vmatprep.subr.bf16.mxu0 0
    %1156 = vmatpush1.bf16.msra.mxu0 0
    %1157 = vmatprep.subr.bf16.mxu0 0
    %1158 = vmatpush1.bf16.msra.mxu0 0
    %1159 = vmatprep.subr.bf16.mxu0 0
    %1160 = vmatpush1.bf16.msra.mxu0 0
    %1161 = vmatprep.subr.bf16.mxu0 0
    %1162 = vmatpush1.bf16.msra.mxu0 0
    %1163 = vmatprep.mubr.bf16.mxu0 0
    %1164 = vmatmul.mubr.bf16.gmra.mrb[0].mxu0 %v1059
    %v1165 = vpop.f32.mrb[0].mxu0
    %v1166 = vadd.f32 %v1082, %v1165
    %v1167 = vpop.f32.mrb[0].mxu0
    %v1168 = vpop.f32.mrb[0].mxu0
    %v1169 = vadd.f32 %v1082, %v1168
    %v1170 = vpop.f32.mrb[0].mxu0
    %1171 = vmatprep.mubr.bf16.mxu0 0
    %1172 = vmatmul.mubr.bf16.gmra.mrb[0].mxu0 %v1060
    %v1173 = vpop.f32.mrb[0].mxu0
    %v1174 = vadd.f32 %v1082, %v1173
    %v1175 = vpop.f32.mrb[0].mxu0
    %v1176 = vpop.f32.mrb[0].mxu0
    %v1177 = vadd.f32 %v1082, %v1176
    %v1178 = vpop.f32.mrb[0].mxu0
    %1179 = vdwg.mxu0
    %v1180 = vmul.f32 %v1166, 0.1
    %v1181 = vmul.f32 %v1169, 0.1
    %v1182 = vmul.f32 %v1174, 0.1
    %v1183 = vmul.f32 %v1177, 0.1
    %v1184 = vmax.f32 %v1166, %v1180
    %v1185 = vmax.f32 %v1169, %v1181
    %v1186 = vmax.f32 %v1174, %v1182
    %v1187 = vmax.f32 %v1177, %v1183
    %v1188 = vpack.c.bf16 %v1185, %v1184
    %v1189 = vpack.c.bf16 %v1187, %v1186
    %s1190 = scalar_lea.vmem [#allocation4], 448
    %v1191 = vld [vmem:[%s1190] sm:$0xf]
    %v1192 = vld [vmem:[%s1190 + $0x4] sm:$0xf]
    %v1193 = vld [vmem:[%s1190 + $0x8] sm:$0xf]
    %v1194 = vld [vmem:[%s1190 + $0xc] sm:$0xf]
    %v1195 = vld [vmem:[%s1190 + $0x10] sm:$0xf]
    %v1196 = vld [vmem:[%s1190 + $0x14] sm:$0xf]
    %v1197 = vld [vmem:[%s1190 + $0x18] sm:$0xf]
    %v1198 = vld [vmem:[%s1190 + $0x1c] sm:$0xf]
    %v1199 = vld [vmem:[%s1190 + $0x20] sm:$0xf]
    %v1200 = vld [vmem:[%s1190 + $0x24] sm:$0xf]
    %v1201 = vld [vmem:[%s1190 + $0x28] sm:$0xf]
    %v1202 = vld [vmem:[%s1190 + $0x2c] sm:$0xf]
    %v1203 = vld [vmem:[%s1190 + $0x30] sm:$0xf]
    %v1204 = vld [vmem:[%s1190 + $0x34] sm:$0xf]
    %v1205 = vld [vmem:[%s1190 + $0x38] sm:$0xf]
    %v1206 = vld [vmem:[%s1190 + $0x3c] sm:$0xf]
    %v1207 = vld [vmem:[%s3 + $0x9] sm:$0x1]
    %v1208 = vlaneseq
    %v1209 = vshrl.u32 %v1208, 7
    %v1210 = vsub.s32 0, %v1209
    %v1211 = vrot.slane %v1207, %v1210
    %v1228 = vunpack.c.l.b16 %v1191
    %v1229 = vunpack.c.l.b16 %v1192
    %v1230 = vunpack.c.l.b16 %v1193
    %v1231 = vunpack.c.l.b16 %v1194
    %v1232 = vunpack.c.l.b16 %v1195
    %v1233 = vunpack.c.l.b16 %v1196
    %v1234 = vunpack.c.l.b16 %v1197
    %v1235 = vunpack.c.l.b16 %v1198
    %v1236 = vunpack.c.l.b16 %v1199
    %v1237 = vunpack.c.l.b16 %v1200
    %v1238 = vunpack.c.l.b16 %v1201
    %v1239 = vunpack.c.l.b16 %v1202
    %v1240 = vunpack.c.l.b16 %v1203
    %v1241 = vunpack.c.l.b16 %v1204
    %v1242 = vunpack.c.l.b16 %v1205
    %v1243 = vunpack.c.l.b16 %v1206
    %v1244 = vpack.c.b16 %v1229, %v1228
    %v1245 = vpack.c.b16 %v1231, %v1230
    %v1246 = vpack.c.b16 %v1233, %v1232
    %v1247 = vpack.c.b16 %v1235, %v1234
    %v1248 = vpack.c.b16 %v1237, %v1236
    %v1249 = vpack.c.b16 %v1239, %v1238
    %v1250 = vpack.c.b16 %v1241, %v1240
    %v1251 = vpack.c.b16 %v1243, %v1242
    %1260 = vmatprep.subr.bf16.mxu0 0
    %1261 = vmatpush1.bf16.msra.mxu0 %v1244
    %1262 = vmatprep.subr.bf16.mxu0 0
    %1263 = vmatpush1.bf16.msra.mxu0 %v1245
    %1264 = vmatprep.subr.bf16.mxu0 0
    %1265 = vmatpush1.bf16.msra.mxu0 %v1246
    %1266 = vmatprep.subr.bf16.mxu0 0
    %1267 = vmatpush1.bf16.msra.mxu0 %v1247
    %1268 = vmatprep.subr.bf16.mxu0 0
    %1269 = vmatpush1.bf16.msra.mxu0 %v1248
    %1270 = vmatprep.subr.bf16.mxu0 0
    %1271 = vmatpush1.bf16.msra.mxu0 %v1249
    %1272 = vmatprep.subr.bf16.mxu0 0
    %1273 = vmatpush1.bf16.msra.mxu0 %v1250
    %1274 = vmatprep.subr.bf16.mxu0 0
    %1275 = vmatpush1.bf16.msra.mxu0 %v1251
    %1276 = vmatprep.subr.bf16.mxu0 0
    %1277 = vmatpush1.bf16.msra.mxu0 0
    %1278 = vmatprep.subr.bf16.mxu0 0
    %1279 = vmatpush1.bf16.msra.mxu0 0
    %1280 = vmatprep.subr.bf16.mxu0 0
    %1281 = vmatpush1.bf16.msra.mxu0 0
    %1282 = vmatprep.subr.bf16.mxu0 0
    %1283 = vmatpush1.bf16.msra.mxu0 0
    %1284 = vmatprep.subr.bf16.mxu0 0
    %1285 = vmatpush1.bf16.msra.mxu0 0
    %1286 = vmatprep.subr.bf16.mxu0 0
    %1287 = vmatpush1.bf16.msra.mxu0 0
    %1288 = vmatprep.subr.bf16.mxu0 0
    %1289 = vmatpush1.bf16.msra.mxu0 0
    %1290 = vmatprep.subr.bf16.mxu0 0
    %1291 = vmatpush1.bf16.msra.mxu0 0
    %1292 = vmatprep.mubr.bf16.mxu0 0
    %1293 = vmatmul.mubr.bf16.gmra.mrb[0].mxu0 %v1188
    %v1294 = vpop.f32.mrb[0].mxu0
    %v1295 = vadd.f32 %v1211, %v1294
    %v1296 = vpop.f32.mrb[0].mxu0
    %v1297 = vpop.f32.mrb[0].mxu0
    %v1298 = vadd.f32 %v1211, %v1297
    %v1299 = vpop.f32.mrb[0].mxu0
    %1300 = vmatprep.mubr.bf16.mxu0 0
    %1301 = vmatmul.mubr.bf16.gmra.mrb[0].mxu0 %v1189
    %v1302 = vpop.f32.mrb[0].mxu0
    %v1303 = vadd.f32 %v1211, %v1302
    %v1304 = vpop.f32.mrb[0].mxu0
    %v1305 = vpop.f32.mrb[0].mxu0
    %v1306 = vadd.f32 %v1211, %v1305
    %v1307 = vpop.f32.mrb[0].mxu0
    %1308 = vdwg.mxu0
    %s1309 = scalar_lea.vmem [#allocation4], 512
    %v1310 = vld [vmem:[%s1309] sm:$0xf]
    %v1311 = vld [vmem:[%s1309 + $0x4] sm:$0xf]
    %v1312 = vld [vmem:[%s1309 + $0x8] sm:$0xf]
    %v1313 = vld [vmem:[%s1309 + $0xc] sm:$0xf]
    %v1314 = vld [vmem:[%s1309 + $0x10] sm:$0xf]
    %v1315 = vld [vmem:[%s1309 + $0x14] sm:$0xf]
    %v1316 = vld [vmem:[%s1309 + $0x18] sm:$0xf]
    %v1317 = vld [vmem:[%s1309 + $0x1c] sm:$0xf]
    %v1318 = vld [vmem:[%s1309 + $0x20] sm:$0xf]
    %v1319 = vld [vmem:[%s1309 + $0x24] sm:$0xf]
    %v1320 = vld [vmem:[%s1309 + $0x28] sm:$0xf]
    %v1321 = vld [vmem:[%s1309 + $0x2c] sm:$0xf]
    %v1322 = vld [vmem:[%s1309 + $0x30] sm:$0xf]
    %v1323 = vld [vmem:[%s1309 + $0x34] sm:$0xf]
    %v1324 = vld [vmem:[%s1309 + $0x38] sm:$0xf]
    %v1325 = vld [vmem:[%s1309 + $0x3c] sm:$0xf]
    %v1342 = vunpack.c.l.b16 %v1310
    %v1343 = vunpack.c.l.b16 %v1311
    %v1344 = vunpack.c.l.b16 %v1312
    %v1345 = vunpack.c.l.b16 %v1313
    %v1346 = vunpack.c.l.b16 %v1314
    %v1347 = vunpack.c.l.b16 %v1315
    %v1348 = vunpack.c.l.b16 %v1316
    %v1349 = vunpack.c.l.b16 %v1317
    %v1350 = vunpack.c.l.b16 %v1318
    %v1351 = vunpack.c.l.b16 %v1319
    %v1352 = vunpack.c.l.b16 %v1320
    %v1353 = vunpack.c.l.b16 %v1321
    %v1354 = vunpack.c.l.b16 %v1322
    %v1355 = vunpack.c.l.b16 %v1323
    %v1356 = vunpack.c.l.b16 %v1324
    %v1357 = vunpack.c.l.b16 %v1325
    %v1358 = vpack.c.b16 %v1343, %v1342
    %v1359 = vpack.c.b16 %v1345, %v1344
    %v1360 = vpack.c.b16 %v1347, %v1346
    %v1361 = vpack.c.b16 %v1349, %v1348
    %v1362 = vpack.c.b16 %v1351, %v1350
    %v1363 = vpack.c.b16 %v1353, %v1352
    %v1364 = vpack.c.b16 %v1355, %v1354
    %v1365 = vpack.c.b16 %v1357, %v1356
    %1374 = vmatprep.subr.bf16.mxu0 0
    %1375 = vmatpush1.bf16.msra.mxu0 %v1358
    %1376 = vmatprep.subr.bf16.mxu0 0
    %1377 = vmatpush1.bf16.msra.mxu0 %v1359
    %1378 = vmatprep.subr.bf16.mxu0 0
    %1379 = vmatpush1.bf16.msra.mxu0 %v1360
    %1380 = vmatprep.subr.bf16.mxu0 0
    %1381 = vmatpush1.bf16.msra.mxu0 %v1361
    %1382 = vmatprep.subr.bf16.mxu0 0
    %1383 = vmatpush1.bf16.msra.mxu0 %v1362
    %1384 = vmatprep.subr.bf16.mxu0 0
    %1385 = vmatpush1.bf16.msra.mxu0 %v1363
    %1386 = vmatprep.subr.bf16.mxu0 0
    %1387 = vmatpush1.bf16.msra.mxu0 %v1364
    %1388 = vmatprep.subr.bf16.mxu0 0
    %1389 = vmatpush1.bf16.msra.mxu0 %v1365
    %1390 = vmatprep.subr.bf16.mxu0 0
    %1391 = vmatpush1.bf16.msra.mxu0 0
    %1392 = vmatprep.subr.bf16.mxu0 0
    %1393 = vmatpush1.bf16.msra.mxu0 0
    %1394 = vmatprep.subr.bf16.mxu0 0
    %1395 = vmatpush1.bf16.msra.mxu0 0
    %1396 = vmatprep.subr.bf16.mxu0 0
    %1397 = vmatpush1.bf16.msra.mxu0 0
    %1398 = vmatprep.subr.bf16.mxu0 0
    %1399 = vmatpush1.bf16.msra.mxu0 0
    %1400 = vmatprep.subr.bf16.mxu0 0
    %1401 = vmatpush1.bf16.msra.mxu0 0
    %1402 = vmatprep.subr.bf16.mxu0 0
    %1403 = vmatpush1.bf16.msra.mxu0 0
    %1404 = vmatprep.subr.bf16.mxu0 0
    %1405 = vmatpush1.bf16.msra.mxu0 0
    %1406 = vmatprep.mubr.bf16.mxu0 0
    %1407 = vmatmul.mubr.bf16.gmra.mrb[0].mxu0 %v1059
    %v1408 = vpop.f32.mrb[0].mxu0
    %v1409 = vadd.f32 0.0, %v1408
    %v1410 = vpop.f32.mrb[0].mxu0
    %v1411 = vpop.f32.mrb[0].mxu0
    %v1412 = vadd.f32 0.0, %v1411
    %v1413 = vpop.f32.mrb[0].mxu0
    %1414 = vmatprep.mubr.bf16.mxu0 0
    %1415 = vmatmul.mubr.bf16.gmra.mrb[0].mxu0 %v1060
    %v1416 = vpop.f32.mrb[0].mxu0
    %v1417 = vadd.f32 0.0, %v1416
    %v1418 = vpop.f32.mrb[0].mxu0
    %v1419 = vpop.f32.mrb[0].mxu0
    %v1420 = vadd.f32 0.0, %v1419
    %v1421 = vpop.f32.mrb[0].mxu0
    %1422 = vdwg.mxu0
    %v1423 = vadd.f32 %v1295, %v1409
    %v1424 = vadd.f32 %v1298, %v1412
    %v1425 = vadd.f32 %v1303, %v1417
    %v1426 = vadd.f32 %v1306, %v1420
    %v1427 = vld [vmem:[%s3 + $0xa] sm:$0x1]
    %v1428 = vlaneseq
    %v1429 = vshrl.u32 %v1428, 7
    %v1430 = vsub.s32 0, %v1429
    %v1431 = vrot.slane %v1427, %v1430
    %v1432 = vadd.f32 %v1423, %v1431
    %v1433 = vadd.f32 %v1424, %v1431
    %v1434 = vadd.f32 %v1425, %v1431
    %v1435 = vadd.f32 %v1426, %v1431
    %v1436 = vmul.f32 %v1432, 0.1
    %v1437 = vmul.f32 %v1433, 0.1
    %v1438 = vmul.f32 %v1434, 0.1
    %v1439 = vmul.f32 %v1435, 0.1
    %v1440 = vmax.f32 %v1432, %v1436
    %v1441 = vmax.f32 %v1433, %v1437
    %v1442 = vmax.f32 %v1434, %v1438
    %v1443 = vmax.f32 %v1435, %v1439
    %v1444 = vpack.c.bf16 %v1441, %v1440
    %v1445 = vpack.c.bf16 %v1443, %v1442
    %s1446 = scalar_lea.vmem [#allocation4], 576
    %v1447 = vld [vmem:[%s1446] sm:$0xf]
    %v1448 = vld [vmem:[%s1446 + $0x4] sm:$0xf]
    %v1449 = vld [vmem:[%s1446 + $0x8] sm:$0xf]
    %v1450 = vld [vmem:[%s1446 + $0xc] sm:$0xf]
    %v1451 = vld [vmem:[%s1446 + $0x10] sm:$0xf]
    %v1452 = vld [vmem:[%s1446 + $0x14] sm:$0xf]
    %v1453 = vld [vmem:[%s1446 + $0x18] sm:$0xf]
    %v1454 = vld [vmem:[%s1446 + $0x1c] sm:$0xf]
    %v1455 = vld [vmem:[%s1446 + $0x20] sm:$0xf]
    %v1456 = vld [vmem:[%s1446 + $0x24] sm:$0xf]
    %v1457 = vld [vmem:[%s1446 + $0x28] sm:$0xf]
    %v1458 = vld [vmem:[%s1446 + $0x2c] sm:$0xf]
    %v1459 = vld [vmem:[%s1446 + $0x30] sm:$0xf]
    %v1460 = vld [vmem:[%s1446 + $0x34] sm:$0xf]
    %v1461 = vld [vmem:[%s1446 + $0x38] sm:$0xf]
    %v1462 = vld [vmem:[%s1446 + $0x3c] sm:$0xf]
    %v1463 = vld [vmem:[%s3 + $0xb] sm:$0x1]
    %v1464 = vlaneseq
    %v1465 = vshrl.u32 %v1464, 7
    %v1466 = vsub.s32 0, %v1465
    %v1467 = vrot.slane %v1463, %v1466
    %v1484 = vunpack.c.l.b16 %v1447
    %v1485 = vunpack.c.l.b16 %v1448
    %v1486 = vunpack.c.l.b16 %v1449
    %v1487 = vunpack.c.l.b16 %v1450
    %v1488 = vunpack.c.l.b16 %v1451
    %v1489 = vunpack.c.l.b16 %v1452
    %v1490 = vunpack.c.l.b16 %v1453
    %v1491 = vunpack.c.l.b16 %v1454
    %v1492 = vunpack.c.l.b16 %v1455
    %v1493 = vunpack.c.l.b16 %v1456
    %v1494 = vunpack.c.l.b16 %v1457
    %v1495 = vunpack.c.l.b16 %v1458
    %v1496 = vunpack.c.l.b16 %v1459
    %v1497 = vunpack.c.l.b16 %v1460
    %v1498 = vunpack.c.l.b16 %v1461
    %v1499 = vunpack.c.l.b16 %v1462
    %v1500 = vpack.c.b16 %v1485, %v1484
    %v1501 = vpack.c.b16 %v1487, %v1486
    %v1502 = vpack.c.b16 %v1489, %v1488
    %v1503 = vpack.c.b16 %v1491, %v1490
    %v1504 = vpack.c.b16 %v1493, %v1492
    %v1505 = vpack.c.b16 %v1495, %v1494
    %v1506 = vpack.c.b16 %v1497, %v1496
    %v1507 = vpack.c.b16 %v1499, %v1498
    %1516 = vmatprep.subr.bf16.mxu0 0
    %1517 = vmatpush1.bf16.msra.mxu0 %v1500
    %1518 = vmatprep.subr.bf16.mxu0 0
    %1519 = vmatpush1.bf16.msra.mxu0 %v1501
    %1520 = vmatprep.subr.bf16.mxu0 0
    %1521 = vmatpush1.bf16.msra.mxu0 %v1502
    %1522 = vmatprep.subr.bf16.mxu0 0
    %1523 = vmatpush1.bf16.msra.mxu0 %v1503
    %1524 = vmatprep.subr.bf16.mxu0 0
    %1525 = vmatpush1.bf16.msra.mxu0 %v1504
    %1526 = vmatprep.subr.bf16.mxu0 0
    %1527 = vmatpush1.bf16.msra.mxu0 %v1505
    %1528 = vmatprep.subr.bf16.mxu0 0
    %1529 = vmatpush1.bf16.msra.mxu0 %v1506
    %1530 = vmatprep.subr.bf16.mxu0 0
    %1531 = vmatpush1.bf16.msra.mxu0 %v1507
    %1532 = vmatprep.subr.bf16.mxu0 0
    %1533 = vmatpush1.bf16.msra.mxu0 0
    %1534 = vmatprep.subr.bf16.mxu0 0
    %1535 = vmatpush1.bf16.msra.mxu0 0
    %1536 = vmatprep.subr.bf16.mxu0 0
    %1537 = vmatpush1.bf16.msra.mxu0 0
    %1538 = vmatprep.subr.bf16.mxu0 0
    %1539 = vmatpush1.bf16.msra.mxu0 0
    %1540 = vmatprep.subr.bf16.mxu0 0
    %1541 = vmatpush1.bf16.msra.mxu0 0
    %1542 = vmatprep.subr.bf16.mxu0 0
    %1543 = vmatpush1.bf16.msra.mxu0 0
    %1544 = vmatprep.subr.bf16.mxu0 0
    %1545 = vmatpush1.bf16.msra.mxu0 0
    %1546 = vmatprep.subr.bf16.mxu0 0
    %1547 = vmatpush1.bf16.msra.mxu0 0
    %1548 = vmatprep.mubr.bf16.mxu0 0
    %1549 = vmatmul.mubr.bf16.gmra.mrb[0].mxu0 %v1444
    %v1550 = vpop.f32.mrb[0].mxu0
    %v1551 = vadd.f32 %v1467, %v1550
    %v1552 = vpop.f32.mrb[0].mxu0
    %v1553 = vpop.f32.mrb[0].mxu0
    %v1554 = vadd.f32 %v1467, %v1553
    %v1555 = vpop.f32.mrb[0].mxu0
    %1556 = vmatprep.mubr.bf16.mxu0 0
    %1557 = vmatmul.mubr.bf16.gmra.mrb[0].mxu0 %v1445
    %v1558 = vpop.f32.mrb[0].mxu0
    %v1559 = vadd.f32 %v1467, %v1558
    %v1560 = vpop.f32.mrb[0].mxu0
    %v1561 = vpop.f32.mrb[0].mxu0
    %v1562 = vadd.f32 %v1467, %v1561
    %v1563 = vpop.f32.mrb[0].mxu0
    %1564 = vdwg.mxu0
    %v1565 = vpack.c.bf16 %v1554, %v1551
    %v1566 = vpack.c.bf16 %v1562, %v1559
    %s1567 = scalar_lea.vmem [#allocation4], 640
    %v1568 = vld [vmem:[%s1567] sm:$0xf]
    %v1569 = vld [vmem:[%s1567 + $0x4] sm:$0xf]
    %v1570 = vld [vmem:[%s1567 + $0x8] sm:$0xf]
    %v1571 = vld [vmem:[%s1567 + $0xc] sm:$0xf]
    %v1572 = vld [vmem:[%s1567 + $0x10] sm:$0xf]
    %v1573 = vld [vmem:[%s1567 + $0x14] sm:$0xf]
    %v1574 = vld [vmem:[%s1567 + $0x18] sm:$0xf]
    %v1575 = vld [vmem:[%s1567 + $0x1c] sm:$0xf]
    %v1576 = vld [vmem:[%s1567 + $0x20] sm:$0xf]
    %v1577 = vld [vmem:[%s1567 + $0x24] sm:$0xf]
    %v1578 = vld [vmem:[%s1567 + $0x28] sm:$0xf]
    %v1579 = vld [vmem:[%s1567 + $0x2c] sm:$0xf]
    %v1580 = vld [vmem:[%s1567 + $0x30] sm:$0xf]
    %v1581 = vld [vmem:[%s1567 + $0x34] sm:$0xf]
    %v1582 = vld [vmem:[%s1567 + $0x38] sm:$0xf]
    %v1583 = vld [vmem:[%s1567 + $0x3c] sm:$0xf]
    %v1584 = vld [vmem:[%s3 + $0xc] sm:$0x1]
    %v1585 = vlaneseq
    %v1586 = vshrl.u32 %v1585, 7
    %v1587 = vsub.s32 0, %v1586
    %v1588 = vrot.slane %v1584, %v1587
    %v1605 = vunpack.c.l.b16 %v1568
    %v1606 = vunpack.c.l.b16 %v1569
    %v1607 = vunpack.c.l.b16 %v1570
    %v1608 = vunpack.c.l.b16 %v1571
    %v1609 = vunpack.c.l.b16 %v1572
    %v1610 = vunpack.c.l.b16 %v1573
    %v1611 = vunpack.c.l.b16 %v1574
    %v1612 = vunpack.c.l.b16 %v1575
    %v1613 = vunpack.c.l.b16 %v1576
    %v1614 = vunpack.c.l.b16 %v1577
    %v1615 = vunpack.c.l.b16 %v1578
    %v1616 = vunpack.c.l.b16 %v1579
    %v1617 = vunpack.c.l.b16 %v1580
    %v1618 = vunpack.c.l.b16 %v1581
    %v1619 = vunpack.c.l.b16 %v1582
    %v1620 = vunpack.c.l.b16 %v1583
    %v1621 = vpack.c.b16 %v1606, %v1605
    %v1622 = vpack.c.b16 %v1608, %v1607
    %v1623 = vpack.c.b16 %v1610, %v1609
    %v1624 = vpack.c.b16 %v1612, %v1611
    %v1625 = vpack.c.b16 %v1614, %v1613
    %v1626 = vpack.c.b16 %v1616, %v1615
    %v1627 = vpack.c.b16 %v1618, %v1617
    %v1628 = vpack.c.b16 %v1620, %v1619
    %1637 = vmatprep.subr.bf16.mxu0 0
    %1638 = vmatpush1.bf16.msra.mxu0 %v1621
    %1639 = vmatprep.subr.bf16.mxu0 0
    %1640 = vmatpush1.bf16.msra.mxu0 %v1622
    %1641 = vmatprep.subr.bf16.mxu0 0
    %1642 = vmatpush1.bf16.msra.mxu0 %v1623
    %1643 = vmatprep.subr.bf16.mxu0 0
    %1644 = vmatpush1.bf16.msra.mxu0 %v1624
    %1645 = vmatprep.subr.bf16.mxu0 0
    %1646 = vmatpush1.bf16.msra.mxu0 %v1625
    %1647 = vmatprep.subr.bf16.mxu0 0
    %1648 = vmatpush1.bf16.msra.mxu0 %v1626
    %1649 = vmatprep.subr.bf16.mxu0 0
    %1650 = vmatpush1.bf16.msra.mxu0 %v1627
    %1651 = vmatprep.subr.bf16.mxu0 0
    %1652 = vmatpush1.bf16.msra.mxu0 %v1628
    %1653 = vmatprep.subr.bf16.mxu0 0
    %1654 = vmatpush1.bf16.msra.mxu0 0
    %1655 = vmatprep.subr.bf16.mxu0 0
    %1656 = vmatpush1.bf16.msra.mxu0 0
    %1657 = vmatprep.subr.bf16.mxu0 0
    %1658 = vmatpush1.bf16.msra.mxu0 0
    %1659 = vmatprep.subr.bf16.mxu0 0
    %1660 = vmatpush1.bf16.msra.mxu0 0
    %1661 = vmatprep.subr.bf16.mxu0 0
    %1662 = vmatpush1.bf16.msra.mxu0 0
    %1663 = vmatprep.subr.bf16.mxu0 0
    %1664 = vmatpush1.bf16.msra.mxu0 0
    %1665 = vmatprep.subr.bf16.mxu0 0
    %1666 = vmatpush1.bf16.msra.mxu0 0
    %1667 = vmatprep.subr.bf16.mxu0 0
    %1668 = vmatpush1.bf16.msra.mxu0 0
    %1669 = vmatprep.mubr.bf16.mxu0 0
    %1670 = vmatmul.mubr.bf16.gmra.mrb[0].mxu0 %v1565
    %v1671 = vpop.f32.mrb[0].mxu0
    %v1672 = vadd.f32 %v1588, %v1671
    %v1673 = vpop.f32.mrb[0].mxu0
    %v1674 = vpop.f32.mrb[0].mxu0
    %v1675 = vadd.f32 %v1588, %v1674
    %v1676 = vpop.f32.mrb[0].mxu0
    %1677 = vmatprep.mubr.bf16.mxu0 0
    %1678 = vmatmul.mubr.bf16.gmra.mrb[0].mxu0 %v1566
    %v1679 = vpop.f32.mrb[0].mxu0
    %v1680 = vadd.f32 %v1588, %v1679
    %v1681 = vpop.f32.mrb[0].mxu0
    %v1682 = vpop.f32.mrb[0].mxu0
    %v1683 = vadd.f32 %v1588, %v1682
    %v1684 = vpop.f32.mrb[0].mxu0
    %1685 = vdwg.mxu0
    %v1686 = vmul.f32 %v1672, 0.1
    %v1687 = vmul.f32 %v1675, 0.1
    %v1688 = vmul.f32 %v1680, 0.1
    %v1689 = vmul.f32 %v1683, 0.1
    %v1690 = vmax.f32 %v1672, %v1686
    %v1691 = vmax.f32 %v1675, %v1687
    %v1692 = vmax.f32 %v1680, %v1688
    %v1693 = vmax.f32 %v1683, %v1689
    %v1694 = vpack.c.bf16 %v1691, %v1690
    %v1695 = vpack.c.bf16 %v1693, %v1692
    %s1696 = scalar_lea.vmem [#allocation4], 704
    %v1697 = vld [vmem:[%s1696] sm:$0xf]
    %v1698 = vld [vmem:[%s1696 + $0x4] sm:$0xf]
    %v1699 = vld [vmem:[%s1696 + $0x8] sm:$0xf]
    %v1700 = vld [vmem:[%s1696 + $0xc] sm:$0xf]
    %v1701 = vld [vmem:[%s1696 + $0x10] sm:$0xf]
    %v1702 = vld [vmem:[%s1696 + $0x14] sm:$0xf]
    %v1703 = vld [vmem:[%s1696 + $0x18] sm:$0xf]
    %v1704 = vld [vmem:[%s1696 + $0x1c] sm:$0xf]
    %v1705 = vld [vmem:[%s1696 + $0x20] sm:$0xf]
    %v1706 = vld [vmem:[%s1696 + $0x24] sm:$0xf]
    %v1707 = vld [vmem:[%s1696 + $0x28] sm:$0xf]
    %v1708 = vld [vmem:[%s1696 + $0x2c] sm:$0xf]
    %v1709 = vld [vmem:[%s1696 + $0x30] sm:$0xf]
    %v1710 = vld [vmem:[%s1696 + $0x34] sm:$0xf]
    %v1711 = vld [vmem:[%s1696 + $0x38] sm:$0xf]
    %v1712 = vld [vmem:[%s1696 + $0x3c] sm:$0xf]
    %v1713 = vld [vmem:[%s3 + $0xd] sm:$0x1]
    %v1714 = vlaneseq
    %v1715 = vshrl.u32 %v1714, 7
    %v1716 = vsub.s32 0, %v1715
    %v1717 = vrot.slane %v1713, %v1716
    %v1734 = vunpack.c.l.b16 %v1697
    %v1735 = vunpack.c.l.b16 %v1698
    %v1736 = vunpack.c.l.b16 %v1699
    %v1737 = vunpack.c.l.b16 %v1700
    %v1738 = vunpack.c.l.b16 %v1701
    %v1739 = vunpack.c.l.b16 %v1702
    %v1740 = vunpack.c.l.b16 %v1703
    %v1741 = vunpack.c.l.b16 %v1704
    %v1742 = vunpack.c.l.b16 %v1705
    %v1743 = vunpack.c.l.b16 %v1706
    %v1744 = vunpack.c.l.b16 %v1707
    %v1745 = vunpack.c.l.b16 %v1708
    %v1746 = vunpack.c.l.b16 %v1709
    %v1747 = vunpack.c.l.b16 %v1710
    %v1748 = vunpack.c.l.b16 %v1711
    %v1749 = vunpack.c.l.b16 %v1712
    %v1750 = vpack.c.b16 %v1735, %v1734
    %v1751 = vpack.c.b16 %v1737, %v1736
    %v1752 = vpack.c.b16 %v1739, %v1738
    %v1753 = vpack.c.b16 %v1741, %v1740
    %v1754 = vpack.c.b16 %v1743, %v1742
    %v1755 = vpack.c.b16 %v1745, %v1744
    %v1756 = vpack.c.b16 %v1747, %v1746
    %v1757 = vpack.c.b16 %v1749, %v1748
    %1766 = vmatprep.subr.bf16.mxu0 0
    %1767 = vmatpush1.bf16.msra.mxu0 %v1750
    %1768 = vmatprep.subr.bf16.mxu0 0
    %1769 = vmatpush1.bf16.msra.mxu0 %v1751
    %1770 = vmatprep.subr.bf16.mxu0 0
    %1771 = vmatpush1.bf16.msra.mxu0 %v1752
    %1772 = vmatprep.subr.bf16.mxu0 0
    %1773 = vmatpush1.bf16.msra.mxu0 %v1753
    %1774 = vmatprep.subr.bf16.mxu0 0
    %1775 = vmatpush1.bf16.msra.mxu0 %v1754
    %1776 = vmatprep.subr.bf16.mxu0 0
    %1777 = vmatpush1.bf16.msra.mxu0 %v1755
    %1778 = vmatprep.subr.bf16.mxu0 0
    %1779 = vmatpush1.bf16.msra.mxu0 %v1756
    %1780 = vmatprep.subr.bf16.mxu0 0
    %1781 = vmatpush1.bf16.msra.mxu0 %v1757
    %1782 = vmatprep.subr.bf16.mxu0 0
    %1783 = vmatpush1.bf16.msra.mxu0 0
    %1784 = vmatprep.subr.bf16.mxu0 0
    %1785 = vmatpush1.bf16.msra.mxu0 0
    %1786 = vmatprep.subr.bf16.mxu0 0
    %1787 = vmatpush1.bf16.msra.mxu0 0
    %1788 = vmatprep.subr.bf16.mxu0 0
    %1789 = vmatpush1.bf16.msra.mxu0 0
    %1790 = vmatprep.subr.bf16.mxu0 0
    %1791 = vmatpush1.bf16.msra.mxu0 0
    %1792 = vmatprep.subr.bf16.mxu0 0
    %1793 = vmatpush1.bf16.msra.mxu0 0
    %1794 = vmatprep.subr.bf16.mxu0 0
    %1795 = vmatpush1.bf16.msra.mxu0 0
    %1796 = vmatprep.subr.bf16.mxu0 0
    %1797 = vmatpush1.bf16.msra.mxu0 0
    %1798 = vmatprep.mubr.bf16.mxu0 0
    %1799 = vmatmul.mubr.bf16.gmra.mrb[0].mxu0 %v1694
    %v1800 = vpop.f32.mrb[0].mxu0
    %v1801 = vadd.f32 %v1717, %v1800
    %v1802 = vpop.f32.mrb[0].mxu0
    %v1803 = vpop.f32.mrb[0].mxu0
    %v1804 = vadd.f32 %v1717, %v1803
    %v1805 = vpop.f32.mrb[0].mxu0
    %1806 = vmatprep.mubr.bf16.mxu0 0
    %1807 = vmatmul.mubr.bf16.gmra.mrb[0].mxu0 %v1695
    %v1808 = vpop.f32.mrb[0].mxu0
    %v1809 = vadd.f32 %v1717, %v1808
    %v1810 = vpop.f32.mrb[0].mxu0
    %v1811 = vpop.f32.mrb[0].mxu0
    %v1812 = vadd.f32 %v1717, %v1811
    %v1813 = vpop.f32.mrb[0].mxu0
    %1814 = vdwg.mxu0
    %v1815 = vlaneseq
    %v1816 = vand.u32 %v1815, 127
    %vm1817 = vcmp.lt.s32.totalorder %v1816, 32
    %v1818 = vsel %vm1817, %v1801, 0.0
    %v1819 = vsel %vm1817, %v1804, 0.0
    %v1820 = vsel %vm1817, %v1809, 0.0
    %v1821 = vsel %vm1817, %v1812, 0.0
    %v1822 = vmul.f32 %v1818, %v1818
    %v1823 = vmul.f32 %v1819, %v1819
    %v1824 = vmul.f32 %v1820, %v1820
    %v1825 = vmul.f32 %v1821, %v1821
    %1826 = vadd.xlane.f32.xlu0 %v1822
    %v1827 = vpop.xlane.xlu0 %1826
    %1828 = vadd.xlane.f32.xlu0 %v1823
    %v1829 = vpop.xlane.xlu0 %1828
    %1830 = vadd.xlane.f32.xlu0 %v1824
    %v1831 = vpop.xlane.xlu0 %1830
    %1832 = vadd.xlane.f32.xlu0 %v1825
    %v1833 = vpop.xlane.xlu0 %1832
    %v1834 = vmax.f32 %v1827, 1e-24
    %v1835 = vmax.f32 %v1829, 1e-24
    %v1836 = vmax.f32 %v1831, 1e-24
    %v1837 = vmax.f32 %v1833, 1e-24
    %v1838 = vrsqrt.pop %v1834
    %v1839 = vrsqrt.pop %v1835
    %v1840 = vrsqrt.pop %v1836
    %v1841 = vrsqrt.pop %v1837
    %v1842 = vmul.f32 %v1818, %v1838
    %v1843 = vmul.f32 %v1819, %v1839
    %v1844 = vmul.f32 %v1820, %v1840
    %v1845 = vmul.f32 %v1821, %v1841
    %s1846 = sld [smem:[#allocation3]]
    %v1847 = vstv %s1846
    %v1848 = vmul.f32 %v1842, %v1847
    %v1849 = vmul.f32 %v1843, %v1847
    %1850 = vmatprep.subr.mxu0 0.0
    %1851 = vmatpush1.xpose.msra.mxu0 %v1844
    %1852 = vmatprep.subr.mxu0 0.0
    %1853 = vmatpush1.xpose.msra.mxu0 %v1845
    %1854 = vmatprep.subr.mxu0 0.0
    %1855 = vmatpush1.xpose.msra.mxu0 0.0
    %1856 = vmatprep.subr.mxu0 0.0
    %1857 = vmatpush1.xpose.msra.mxu0 0.0
    %1858 = vmatprep.subr.mxu0 0.0
    %1859 = vmatpush1.xpose.msra.mxu0 0.0
    %1860 = vmatprep.subr.mxu0 0.0
    %1861 = vmatpush1.xpose.msra.mxu0 0.0
    %1862 = vmatprep.subr.mxu0 0.0
    %1863 = vmatpush1.xpose.msra.mxu0 0.0
    %1864 = vmatprep.subr.mxu0 0.0
    %1865 = vmatpush1.xpose.msra.mxu0 0.0
    %1866 = vmatprep.subr.mxu0 0.0
    %1867 = vmatpush1.xpose.msra.mxu0 0.0
    %1868 = vmatprep.subr.mxu0 0.0
    %1869 = vmatpush1.xpose.msra.mxu0 0.0
    %1870 = vmatprep.subr.mxu0 0.0
    %1871 = vmatpush1.xpose.msra.mxu0 0.0
    %1872 = vmatprep.subr.mxu0 0.0
    %1873 = vmatpush1.xpose.msra.mxu0 0.0
    %1874 = vmatprep.subr.mxu0 0.0
    %1875 = vmatpush1.xpose.msra.mxu0 0.0
    %1876 = vmatprep.subr.mxu0 0.0
    %1877 = vmatpush1.xpose.msra.mxu0 0.0
    %1878 = vmatprep.subr.mxu0 0.0
    %1879 = vmatpush1.xpose.msra.mxu0 0.0
    %1880 = vmatprep.subr.mxu0 0.0
    %1881 = vmatpush1.xpose.msra.mxu0 0.0
    %1882 = vmatprep.subr.mxu0 0.0
    %1883 = vmatpush1.xpose.msra.mxu0 0.0
    %1884 = vmatprep.subr.mxu0 0.0
    %1885 = vmatpush1.xpose.msra.mxu0 0.0
    %1886 = vmatprep.subr.mxu0 0.0
    %1887 = vmatpush1.xpose.msra.mxu0 0.0
    %1888 = vmatprep.subr.mxu0 0.0
    %1889 = vmatpush1.xpose.msra.mxu0 0.0
    %1890 = vmatprep.subr.mxu0 0.0
    %1891 = vmatpush1.xpose.msra.mxu0 0.0
    %1892 = vmatprep.subr.mxu0 0.0
    %1893 = vmatpush1.xpose.msra.mxu0 0.0
    %1894 = vmatprep.subr.mxu0 0.0
    %1895 = vmatpush1.xpose.msra.mxu0 0.0
    %1896 = vmatprep.subr.mxu0 0.0
    %1897 = vmatpush1.xpose.msra.mxu0 0.0
    %1898 = vmatprep.subr.mxu0 0.0
    %1899 = vmatpush1.xpose.msra.mxu0 0.0
    %1900 = vmatprep.subr.mxu0 0.0
    %1901 = vmatpush1.xpose.msra.mxu0 0.0
    %1902 = vmatprep.subr.mxu0 0.0
    %1903 = vmatpush1.xpose.msra.mxu0 0.0
    %1904 = vmatprep.subr.mxu0 0.0
    %1905 = vmatpush1.xpose.msra.mxu0 0.0
    %1906 = vmatprep.subr.mxu0 0.0
    %1907 = vmatpush1.xpose.msra.mxu0 0.0
    %1908 = vmatprep.subr.mxu0 0.0
    %1909 = vmatpush1.xpose.msra.mxu0 0.0
    %1910 = vmatprep.subr.mxu0 0.0
    %1911 = vmatpush1.xpose.msra.mxu0 0.0
    %1912 = vmatprep.subr.mxu0 0.0
    %1913 = vmatpush1.xpose.msra.mxu0 0.0
    %1914 = vmatprep.mubr.f32.mxu0 0.0
    %1915 = vmatmul.mubr.f32.gmra.mrb[0].mxu0 %v1848
    %v1916 = vpop.f32.mrb[0].mxu0
    %v1917 = vadd.f32 0.0, %v1916
    %v1918 = vpop.f32.mrb[0].mxu0
    %1919 = vmatprep.mubr.f32.mxu0 0.0
    %1920 = vmatmul.mubr.f32.gmra.mrb[0].mxu0 %v1849
    %v1921 = vpop.f32.mrb[0].mxu0
    %v1922 = vadd.f32 0.0, %v1921
    %v1923 = vpop.f32.mrb[0].mxu0
    %1924 = vdwg.mxu0
    %1925 = vmatprep.subr.mxu0 0.0
    %1926 = vmatpush1.xpose.msra.mxu0 %v1848
    %1927 = vmatprep.subr.mxu0 0.0
    %1928 = vmatpush1.xpose.msra.mxu0 %v1849
    %1929 = vmatprep.subr.mxu0 0.0
    %1930 = vmatpush1.xpose.msra.mxu0 0.0
    %1931 = vmatprep.subr.mxu0 0.0
    %1932 = vmatpush1.xpose.msra.mxu0 0.0
    %1933 = vmatprep.subr.mxu0 0.0
    %1934 = vmatpush1.xpose.msra.mxu0 0.0
    %1935 = vmatprep.subr.mxu0 0.0
    %1936 = vmatpush1.xpose.msra.mxu0 0.0
    %1937 = vmatprep.subr.mxu0 0.0
    %1938 = vmatpush1.xpose.msra.mxu0 0.0
    %1939 = vmatprep.subr.mxu0 0.0
    %1940 = vmatpush1.xpose.msra.mxu0 0.0
    %1941 = vmatprep.subr.mxu0 0.0
    %1942 = vmatpush1.xpose.msra.mxu0 0.0
    %1943 = vmatprep.subr.mxu0 0.0
    %1944 = vmatpush1.xpose.msra.mxu0 0.0
    %1945 = vmatprep.subr.mxu0 0.0
    %1946 = vmatpush1.xpose.msra.mxu0 0.0
    %1947 = vmatprep.subr.mxu0 0.0
    %1948 = vmatpush1.xpose.msra.mxu0 0.0
    %1949 = vmatprep.subr.mxu0 0.0
    %1950 = vmatpush1.xpose.msra.mxu0 0.0
    %1951 = vmatprep.subr.mxu0 0.0
    %1952 = vmatpush1.xpose.msra.mxu0 0.0
    %1953 = vmatprep.subr.mxu0 0.0
    %1954 = vmatpush1.xpose.msra.mxu0 0.0
    %1955 = vmatprep.subr.mxu0 0.0
    %1956 = vmatpush1.xpose.msra.mxu0 0.0
    %1957 = vmatprep.subr.mxu0 0.0
    %1958 = vmatpush1.xpose.msra.mxu0 0.0
    %1959 = vmatprep.subr.mxu0 0.0
    %1960 = vmatpush1.xpose.msra.mxu0 0.0
    %1961 = vmatprep.subr.mxu0 0.0
    %1962 = vmatpush1.xpose.msra.mxu0 0.0
    %1963 = vmatprep.subr.mxu0 0.0
    %1964 = vmatpush1.xpose.msra.mxu0 0.0
    %1965 = vmatprep.subr.mxu0 0.0
    %1966 = vmatpush1.xpose.msra.mxu0 0.0
    %1967 = vmatprep.subr.mxu0 0.0
    %1968 = vmatpush1.xpose.msra.mxu0 0.0
    %1969 = vmatprep.subr.mxu0 0.0
    %1970 = vmatpush1.xpose.msra.mxu0 0.0
    %1971 = vmatprep.subr.mxu0 0.0
    %1972 = vmatpush1.xpose.msra.mxu0 0.0
    %1973 = vmatprep.subr.mxu0 0.0
    %1974 = vmatpush1.xpose.msra.mxu0 0.0
    %1975 = vmatprep.subr.mxu0 0.0
    %1976 = vmatpush1.xpose.msra.mxu0 0.0
    %1977 = vmatprep.subr.mxu0 0.0
    %1978 = vmatpush1.xpose.msra.mxu0 0.0
    %1979 = vmatprep.subr.mxu0 0.0
    %1980 = vmatpush1.xpose.msra.mxu0 0.0
    %1981 = vmatprep.subr.mxu0 0.0
    %1982 = vmatpush1.xpose.msra.mxu0 0.0
    %1983 = vmatprep.subr.mxu0 0.0
    %1984 = vmatpush1.xpose.msra.mxu0 0.0
    %1985 = vmatprep.subr.mxu0 0.0
    %1986 = vmatpush1.xpose.msra.mxu0 0.0
    %1987 = vmatprep.subr.mxu0 0.0
    %1988 = vmatpush1.xpose.msra.mxu0 0.0
    %1989 = vmatprep.mubr.f32.mxu0 0.0
    %1990 = vmatmul.mubr.f32.gmra.mrb[0].mxu0 %v1844
    %v1991 = vpop.f32.mrb[0].mxu0
    %v1992 = vadd.f32 0.0, %v1991
    %v1993 = vpop.f32.mrb[0].mxu0
    %1994 = vmatprep.mubr.f32.mxu0 0.0
    %1995 = vmatmul.mubr.f32.gmra.mrb[0].mxu0 %v1845
    %v1996 = vpop.f32.mrb[0].mxu0
    %v1997 = vadd.f32 0.0, %v1996
    %v1998 = vpop.f32.mrb[0].mxu0
    %1999 = vdwg.mxu0
    %vm2000 = vcmask 130048
    %v2001 = vsel %vm2000, %v1917, -inf
    %2002 = vmax.xlane.f32.xlu0 %v2001
    %v2003 = vpop.xlane.xlu0 %2002
    %v2004 = vsel %vm2000, %v1922, -inf
    %2005 = vmax.xlane.f32.xlu0 %v2004
    %v2006 = vpop.xlane.xlu0 %2005
    %v2007 = vsub.f32 %v1917, %v2003
    %v2008 = vsub.f32 %v1922, %v2006
    %v2009 = vmul.f32 %v2007, 1.442695
    %v2010 = vpow.pop %v2009
    %v2011 = vmul.f32 %v2008, 1.442695
    %v2012 = vpow.pop %v2011
    %v2013 = vsel %vm2000, %v2010, 0.0
    %2014 = vadd.xlane.f32.xlu0 %v2013
    %v2015 = vpop.xlane.xlu0 %2014
    %v2016 = vsel %vm2000, %v2012, 0.0
    %2017 = vadd.xlane.f32.xlu0 %v2016
    %v2018 = vpop.xlane.xlu0 %2017
    %v2019 = vrcp.pop %v2015
    %v2020 = vrcp.pop %v2018
    %v2021 = vmul.f32 %v2010, %v2019
    %v2022 = vmul.f32 %v2012, %v2020
    %v2023 = vsel %vm2000, %v1992, -inf
    %2024 = vmax.xlane.f32.xlu0 %v2023
    %v2025 = vpop.xlane.xlu0 %2024
    %v2026 = vsel %vm2000, %v1997, -inf
    %2027 = vmax.xlane.f32.xlu0 %v2026
    %v2028 = vpop.xlane.xlu0 %2027
    %v2029 = vsub.f32 %v1992, %v2025
    %v2030 = vsub.f32 %v1997, %v2028
    %v2031 = vmul.f32 %v2029, 1.442695
    %v2032 = vpow.pop %v2031
    %v2033 = vmul.f32 %v2030, 1.442695
    %v2034 = vpow.pop %v2033
    %v2035 = vsel %vm2000, %v2032, 0.0
    %2036 = vadd.xlane.f32.xlu0 %v2035
    %v2037 = vpop.xlane.xlu0 %2036
    %v2038 = vsel %vm2000, %v2034, 0.0
    %2039 = vadd.xlane.f32.xlu0 %v2038
    %v2040 = vpop.xlane.xlu0 %2039
    %v2041 = vrcp.pop %v2037
    %v2042 = vrcp.pop %v2040
    %v2043 = vmul.f32 %v2032, %v2041
    %v2044 = vmul.f32 %v2034, %v2042
    %v2045 = vld [vmem:[%s3 + $0xf] sm:$0x1]
    %2047 = vset.pattern.permute.xlu0 32
    %2048 = vperm.xlu0 %2047, %v1809
    %v2049 = vpop.permute.xlu0 %2048
    %2052 = vset.pattern.permute.xlu0 32
    %2053 = vperm.xlu0 %2052, %v1812
    %v2054 = vpop.permute.xlu0 %2053
    %v2056 = vlaneseq
    %v2057 = vshrl.u32 %v2056, 7
    %v2058 = vsub.s32 0, %v2057
    %v2059 = vrot.slane %v2045, %v2058
    %v2060 = vmul.f32 %v2049, %v2059
    %v2061 = vmul.f32 %v2054, %v2059
    %v2063 = vsel %vm2000, %v2021, 0
    %v2066 = vsel %vm2000, %v2022, 0
    %2068 = vmatprep.subr.mxu0 0.0
    %2069 = vmatpush1.msra.mxu0 %v2060
    %2070 = vmatprep.subr.mxu0 0.0
    %2071 = vmatpush1.msra.mxu0 %v2061
    %2072 = vmatprep.subr.mxu0 0.0
    %2073 = vmatpush1.msra.mxu0 0.0
    %2074 = vmatprep.subr.mxu0 0.0
    %2075 = vmatpush1.msra.mxu0 0.0
    %2076 = vmatprep.subr.mxu0 0.0
    %2077 = vmatpush1.msra.mxu0 0.0
    %2078 = vmatprep.subr.mxu0 0.0
    %2079 = vmatpush1.msra.mxu0 0.0
    %2080 = vmatprep.subr.mxu0 0.0
    %2081 = vmatpush1.msra.mxu0 0.0
    %2082 = vmatprep.subr.mxu0 0.0
    %2083 = vmatpush1.msra.mxu0 0.0
    %2084 = vmatprep.subr.mxu0 0.0
    %2085 = vmatpush1.msra.mxu0 0.0
    %2086 = vmatprep.subr.mxu0 0.0
    %2087 = vmatpush1.msra.mxu0 0.0
    %2088 = vmatprep.subr.mxu0 0.0
    %2089 = vmatpush1.msra.mxu0 0.0
    %2090 = vmatprep.subr.mxu0 0.0
    %2091 = vmatpush1.msra.mxu0 0.0
    %2092 = vmatprep.subr.mxu0 0.0
    %2093 = vmatpush1.msra.mxu0 0.0
    %2094 = vmatprep.subr.mxu0 0.0
    %2095 = vmatpush1.msra.mxu0 0.0
    %2096 = vmatprep.subr.mxu0 0.0
    %2097 = vmatpush1.msra.mxu0 0.0
    %2098 = vmatprep.subr.mxu0 0.0
    %2099 = vmatpush1.msra.mxu0 0.0
    %2100 = vmatprep.subr.mxu0 0.0
    %2101 = vmatpush1.msra.mxu0 0.0
    %2102 = vmatprep.subr.mxu0 0.0
    %2103 = vmatpush1.msra.mxu0 0.0
    %2104 = vmatprep.subr.mxu0 0.0
    %2105 = vmatpush1.msra.mxu0 0.0
    %2106 = vmatprep.subr.mxu0 0.0
    %2107 = vmatpush1.msra.mxu0 0.0
    %2108 = vmatprep.subr.mxu0 0.0
    %2109 = vmatpush1.msra.mxu0 0.0
    %2110 = vmatprep.subr.mxu0 0.0
    %2111 = vmatpush1.msra.mxu0 0.0
    %2112 = vmatprep.subr.mxu0 0.0
    %2113 = vmatpush1.msra.mxu0 0.0
    %2114 = vmatprep.subr.mxu0 0.0
    %2115 = vmatpush1.msra.mxu0 0.0
    %2116 = vmatprep.subr.mxu0 0.0
    %2117 = vmatpush1.msra.mxu0 0.0
    %2118 = vmatprep.subr.mxu0 0.0
    %2119 = vmatpush1.msra.mxu0 0.0
    %2120 = vmatprep.subr.mxu0 0.0
    %2121 = vmatpush1.msra.mxu0 0.0
    %2122 = vmatprep.subr.mxu0 0.0
    %2123 = vmatpush1.msra.mxu0 0.0
    %2124 = vmatprep.subr.mxu0 0.0
    %2125 = vmatpush1.msra.mxu0 0.0
    %2126 = vmatprep.subr.mxu0 0.0
    %2127 = vmatpush1.msra.mxu0 0.0
    %2128 = vmatprep.subr.mxu0 0.0
    %2129 = vmatpush1.msra.mxu0 0.0
    %2130 = vmatprep.subr.mxu0 0.0
    %2131 = vmatpush1.msra.mxu0 0.0
    %2132 = vmatprep.mubr.f32.mxu0 0.0
    %2133 = vmatmul.mubr.f32.gmra.mrb[0].mxu0 %v2063
    %v2134 = vpop.f32.mrb[0].mxu0
    %v2135 = vadd.f32 0.0, %v2134
    %v2136 = vpop.f32.mrb[0].mxu0
    %2137 = vmatprep.mubr.f32.mxu0 0.0
    %2138 = vmatmul.mubr.f32.gmra.mrb[0].mxu0 %v2066
    %v2139 = vpop.f32.mrb[0].mxu0
    %v2140 = vadd.f32 0.0, %v2139
    %v2141 = vpop.f32.mrb[0].mxu0
    %2142 = vdwg.mxu0
    %2144 = vset.pattern.permute.xlu0 32
    %2145 = vperm.xlu0 %2144, %v1801
    %v2146 = vpop.permute.xlu0 %2145
    %2149 = vset.pattern.permute.xlu0 32
    %2150 = vperm.xlu0 %2149, %v1804
    %v2151 = vpop.permute.xlu0 %2150
    %v2153 = vmul.f32 %v2146, %v2059
    %v2154 = vmul.f32 %v2151, %v2059
    %v2156 = vsel %vm2000, %v2043, 0
    %v2159 = vsel %vm2000, %v2044, 0
    %2161 = vmatprep.subr.mxu0 0.0
    %2162 = vmatpush1.msra.mxu0 %v2153
    %2163 = vmatprep.subr.mxu0 0.0
    %2164 = vmatpush1.msra.mxu0 %v2154
    %2165 = vmatprep.subr.mxu0 0.0
    %2166 = vmatpush1.msra.mxu0 0.0
    %2167 = vmatprep.subr.mxu0 0.0
    %2168 = vmatpush1.msra.mxu0 0.0
    %2169 = vmatprep.subr.mxu0 0.0
    %2170 = vmatpush1.msra.mxu0 0.0
    %2171 = vmatprep.subr.mxu0 0.0
    %2172 = vmatpush1.msra.mxu0 0.0
    %2173 = vmatprep.subr.mxu0 0.0
    %2174 = vmatpush1.msra.mxu0 0.0
    %2175 = vmatprep.subr.mxu0 0.0
    %2176 = vmatpush1.msra.mxu0 0.0
    %2177 = vmatprep.subr.mxu0 0.0
    %2178 = vmatpush1.msra.mxu0 0.0
    %2179 = vmatprep.subr.mxu0 0.0
    %2180 = vmatpush1.msra.mxu0 0.0
    %2181 = vmatprep.subr.mxu0 0.0
    %2182 = vmatpush1.msra.mxu0 0.0
    %2183 = vmatprep.subr.mxu0 0.0
    %2184 = vmatpush1.msra.mxu0 0.0
    %2185 = vmatprep.subr.mxu0 0.0
    %2186 = vmatpush1.msra.mxu0 0.0
    %2187 = vmatprep.subr.mxu0 0.0
    %2188 = vmatpush1.msra.mxu0 0.0
    %2189 = vmatprep.subr.mxu0 0.0
    %2190 = vmatpush1.msra.mxu0 0.0
    %2191 = vmatprep.subr.mxu0 0.0
    %2192 = vmatpush1.msra.mxu0 0.0
    %2193 = vmatprep.subr.mxu0 0.0
    %2194 = vmatpush1.msra.mxu0 0.0
    %2195 = vmatprep.subr.mxu0 0.0
    %2196 = vmatpush1.msra.mxu0 0.0
    %2197 = vmatprep.subr.mxu0 0.0
    %2198 = vmatpush1.msra.mxu0 0.0
    %2199 = vmatprep.subr.mxu0 0.0
    %2200 = vmatpush1.msra.mxu0 0.0
    %2201 = vmatprep.subr.mxu0 0.0
    %2202 = vmatpush1.msra.mxu0 0.0
    %2203 = vmatprep.subr.mxu0 0.0
    %2204 = vmatpush1.msra.mxu0 0.0
    %2205 = vmatprep.subr.mxu0 0.0
    %2206 = vmatpush1.msra.mxu0 0.0
    %2207 = vmatprep.subr.mxu0 0.0
    %2208 = vmatpush1.msra.mxu0 0.0
    %2209 = vmatprep.subr.mxu0 0.0
    %2210 = vmatpush1.msra.mxu0 0.0
    %2211 = vmatprep.subr.mxu0 0.0
    %2212 = vmatpush1.msra.mxu0 0.0
    %2213 = vmatprep.subr.mxu0 0.0
    %2214 = vmatpush1.msra.mxu0 0.0
    %2215 = vmatprep.subr.mxu0 0.0
    %2216 = vmatpush1.msra.mxu0 0.0
    %2217 = vmatprep.subr.mxu0 0.0
    %2218 = vmatpush1.msra.mxu0 0.0
    %2219 = vmatprep.subr.mxu0 0.0
    %2220 = vmatpush1.msra.mxu0 0.0
    %2221 = vmatprep.subr.mxu0 0.0
    %2222 = vmatpush1.msra.mxu0 0.0
    %2223 = vmatprep.subr.mxu0 0.0
    %2224 = vmatpush1.msra.mxu0 0.0
    %2225 = vmatprep.mubr.f32.mxu0 0.0
    %2226 = vmatmul.mubr.f32.gmra.mrb[0].mxu0 %v2156
    %v2227 = vpop.f32.mrb[0].mxu0
    %v2228 = vadd.f32 0.0, %v2227
    %v2229 = vpop.f32.mrb[0].mxu0
    %2230 = vmatprep.mubr.f32.mxu0 0.0
    %2231 = vmatmul.mubr.f32.gmra.mrb[0].mxu0 %v2159
    %v2232 = vpop.f32.mrb[0].mxu0
    %v2233 = vadd.f32 0.0, %v2232
    %v2234 = vpop.f32.mrb[0].mxu0
    %2235 = vdwg.mxu0
    %v2236 = vpack.c.bf16 %v1804, %v1801
    %v2237 = vpack.c.bf16 %v1812, %v1809
    %s2238 = scalar_lea.vmem [#allocation4], 768
    %v2239 = vld [vmem:[%s2238] sm:$0xf]
    %v2240 = vld [vmem:[%s2238 + $0x4] sm:$0xf]
    %v2241 = vld [vmem:[%s2238 + $0x8] sm:$0xf]
    %v2242 = vld [vmem:[%s2238 + $0xc] sm:$0xf]
    %v2243 = vld [vmem:[%s2238 + $0x10] sm:$0xf]
    %v2244 = vld [vmem:[%s2238 + $0x14] sm:$0xf]
    %v2245 = vld [vmem:[%s2238 + $0x18] sm:$0xf]
    %v2246 = vld [vmem:[%s2238 + $0x1c] sm:$0xf]
    %v2247 = vld [vmem:[%s2238 + $0x20] sm:$0xf]
    %v2248 = vld [vmem:[%s2238 + $0x24] sm:$0xf]
    %v2249 = vld [vmem:[%s2238 + $0x28] sm:$0xf]
    %v2250 = vld [vmem:[%s2238 + $0x2c] sm:$0xf]
    %v2251 = vld [vmem:[%s2238 + $0x30] sm:$0xf]
    %v2252 = vld [vmem:[%s2238 + $0x34] sm:$0xf]
    %v2253 = vld [vmem:[%s2238 + $0x38] sm:$0xf]
    %v2254 = vld [vmem:[%s2238 + $0x3c] sm:$0xf]
    %v2271 = vunpack.c.l.b16 %v2239
    %v2272 = vunpack.c.l.b16 %v2240
    %v2273 = vunpack.c.l.b16 %v2241
    %v2274 = vunpack.c.l.b16 %v2242
    %v2275 = vunpack.c.l.b16 %v2243
    %v2276 = vunpack.c.l.b16 %v2244
    %v2277 = vunpack.c.l.b16 %v2245
    %v2278 = vunpack.c.l.b16 %v2246
    %v2279 = vunpack.c.l.b16 %v2247
    %v2280 = vunpack.c.l.b16 %v2248
    %v2281 = vunpack.c.l.b16 %v2249
    %v2282 = vunpack.c.l.b16 %v2250
    %v2283 = vunpack.c.l.b16 %v2251
    %v2284 = vunpack.c.l.b16 %v2252
    %v2285 = vunpack.c.l.b16 %v2253
    %v2286 = vunpack.c.l.b16 %v2254
    %v2287 = vpack.c.b16 %v2272, %v2271
    %v2288 = vpack.c.b16 %v2274, %v2273
    %v2289 = vpack.c.b16 %v2276, %v2275
    %v2290 = vpack.c.b16 %v2278, %v2277
    %v2291 = vpack.c.b16 %v2280, %v2279
    %v2292 = vpack.c.b16 %v2282, %v2281
    %v2293 = vpack.c.b16 %v2284, %v2283
    %v2294 = vpack.c.b16 %v2286, %v2285
    %2303 = vmatprep.subr.bf16.mxu0 0
    %2304 = vmatpush1.bf16.msra.mxu0 %v2287
    %2305 = vmatprep.subr.bf16.mxu0 0
    %2306 = vmatpush1.bf16.msra.mxu0 %v2288
    %2307 = vmatprep.subr.bf16.mxu0 0
    %2308 = vmatpush1.bf16.msra.mxu0 %v2289
    %2309 = vmatprep.subr.bf16.mxu0 0
    %2310 = vmatpush1.bf16.msra.mxu0 %v2290
    %2311 = vmatprep.subr.bf16.mxu0 0
    %2312 = vmatpush1.bf16.msra.mxu0 %v2291
    %2313 = vmatprep.subr.bf16.mxu0 0
    %2314 = vmatpush1.bf16.msra.mxu0 %v2292
    %2315 = vmatprep.subr.bf16.mxu0 0
    %2316 = vmatpush1.bf16.msra.mxu0 %v2293
    %2317 = vmatprep.subr.bf16.mxu0 0
    %2318 = vmatpush1.bf16.msra.mxu0 %v2294
    %2319 = vmatprep.subr.bf16.mxu0 0
    %2320 = vmatpush1.bf16.msra.mxu0 0
    %2321 = vmatprep.subr.bf16.mxu0 0
    %2322 = vmatpush1.bf16.msra.mxu0 0
    %2323 = vmatprep.subr.bf16.mxu0 0
    %2324 = vmatpush1.bf16.msra.mxu0 0
    %2325 = vmatprep.subr.bf16.mxu0 0
    %2326 = vmatpush1.bf16.msra.mxu0 0
    %2327 = vmatprep.subr.bf16.mxu0 0
    %2328 = vmatpush1.bf16.msra.mxu0 0
    %2329 = vmatprep.subr.bf16.mxu0 0
    %2330 = vmatpush1.bf16.msra.mxu0 0
    %2331 = vmatprep.subr.bf16.mxu0 0
    %2332 = vmatpush1.bf16.msra.mxu0 0
    %2333 = vmatprep.subr.bf16.mxu0 0
    %2334 = vmatpush1.bf16.msra.mxu0 0
    %2335 = vmatprep.mubr.bf16.mxu0 0
    %2336 = vmatmul.mubr.bf16.gmra.mrb[0].mxu0 %v2236
    %v2337 = vpop.f32.mrb[0].mxu0
    %v2338 = vadd.f32 %v2135, %v2337
    %v2339 = vpop.f32.mrb[0].mxu0
    %v2340 = vpop.f32.mrb[0].mxu0
    %v2341 = vadd.f32 %v2140, %v2340
    %v2342 = vpop.f32.mrb[0].mxu0
    %2343 = vmatprep.mubr.bf16.mxu0 0
    %2344 = vmatmul.mubr.bf16.gmra.mrb[0].mxu0 %v2237
    %v2345 = vpop.f32.mrb[0].mxu0
    %v2346 = vadd.f32 %v2228, %v2345
    %v2347 = vpop.f32.mrb[0].mxu0
    %v2348 = vpop.f32.mrb[0].mxu0
    %v2349 = vadd.f32 %v2233, %v2348
    %v2350 = vpop.f32.mrb[0].mxu0
    %2351 = vdwg.mxu0
    %2352 = vst [vmem:[#allocation2] ss:$2 sm:$0xff] %v2338
    %2353 = vst [vmem:[%s1053] ss:$2 sm:$0xff] %v2341
    %2354 = vst [vmem:[%s1055] ss:$2 sm:$0xff] %v2346
    %2355 = vst [vmem:[%s1057] ss:$2 sm:$0xff] %v2349
    %s2356 = scalar_lea.vmem [#allocation2], 1
    %2357 = vst [vmem:[%s2356] ss:$2 sm:$0xff] %v2338
    %s2358 = scalar_lea.vmem [#allocation2], 17
    %2359 = vst [vmem:[%s2358] ss:$2 sm:$0xff] %v2341
    %s2360 = scalar_lea.vmem [#allocation2], 33
    %2361 = vst [vmem:[%s2360] ss:$2 sm:$0xff] %v2346
    %s2362 = scalar_lea.vmem [#allocation2], 49
    %2363 = vst [vmem:[%s2362] ss:$2 sm:$0xff] %v2349
    %v2364 = vld [vmem:[#allocation2] sm:$0xff]
    %v2365 = vld [vmem:[#allocation2 + $0x8] sm:$0xff]
    %v2366 = vld [vmem:[#allocation2 + $0x10] sm:$0xff]
    %v2367 = vld [vmem:[#allocation2 + $0x18] sm:$0xff]
    %v2368 = vld [vmem:[#allocation2 + $0x20] sm:$0xff]
    %v2369 = vld [vmem:[#allocation2 + $0x28] sm:$0xff]
    %v2370 = vld [vmem:[#allocation2 + $0x30] sm:$0xff]
    %v2371 = vld [vmem:[#allocation2 + $0x38] sm:$0xff]
    %s2372 = scalar_lea.vmem [#allocation4], 832
    %v2373 = vld [vmem:[%s2372] sm:$0xf]
    %v2374 = vld [vmem:[%s2372 + $0x4] sm:$0xf]
    %v2375 = vld [vmem:[%s2372 + $0x8] sm:$0xf]
    %v2376 = vld [vmem:[%s2372 + $0xc] sm:$0xf]
    %v2377 = vld [vmem:[%s2372 + $0x10] sm:$0xf]
    %v2378 = vld [vmem:[%s2372 + $0x14] sm:$0xf]
    %v2379 = vld [vmem:[%s2372 + $0x18] sm:$0xf]
    %v2380 = vld [vmem:[%s2372 + $0x1c] sm:$0xf]
    %v2381 = vld [vmem:[%s2372 + $0x20] sm:$0xf]
    %v2382 = vld [vmem:[%s2372 + $0x24] sm:$0xf]
    %v2383 = vld [vmem:[%s2372 + $0x28] sm:$0xf]
    %v2384 = vld [vmem:[%s2372 + $0x2c] sm:$0xf]
    %v2385 = vld [vmem:[%s2372 + $0x30] sm:$0xf]
    %v2386 = vld [vmem:[%s2372 + $0x34] sm:$0xf]
    %v2387 = vld [vmem:[%s2372 + $0x38] sm:$0xf]
    %v2388 = vld [vmem:[%s2372 + $0x3c] sm:$0xf]
    %v2405 = vunpack.c.l.b16 %v2373
    %v2406 = vunpack.c.l.b16 %v2374
    %v2407 = vunpack.c.l.b16 %v2375
    %v2408 = vunpack.c.l.b16 %v2376
    %v2409 = vunpack.c.l.b16 %v2377
    %v2410 = vunpack.c.l.b16 %v2378
    %v2411 = vunpack.c.l.b16 %v2379
    %v2412 = vunpack.c.l.b16 %v2380
    %v2413 = vunpack.c.l.b16 %v2381
    %v2414 = vunpack.c.l.b16 %v2382
    %v2415 = vunpack.c.l.b16 %v2383
    %v2416 = vunpack.c.l.b16 %v2384
    %v2417 = vunpack.c.l.b16 %v2385
    %v2418 = vunpack.c.l.b16 %v2386
    %v2419 = vunpack.c.l.b16 %v2387
    %v2420 = vunpack.c.l.b16 %v2388
    %v2421 = vpack.c.b16 %v2406, %v2405
    %v2422 = vpack.c.b16 %v2408, %v2407
    %v2423 = vpack.c.b16 %v2410, %v2409
    %v2424 = vpack.c.b16 %v2412, %v2411
    %v2425 = vpack.c.b16 %v2414, %v2413
    %v2426 = vpack.c.b16 %v2416, %v2415
    %v2427 = vpack.c.b16 %v2418, %v2417
    %v2428 = vpack.c.b16 %v2420, %v2419
    %2437 = vmatprep.subr.bf16.mxu0 0
    %2438 = vmatpush1.bf16.msra.mxu0 %v2421
    %2439 = vmatprep.subr.bf16.mxu0 0
    %2440 = vmatpush1.bf16.msra.mxu0 %v2422
    %2441 = vmatprep.subr.bf16.mxu0 0
    %2442 = vmatpush1.bf16.msra.mxu0 %v2423
    %2443 = vmatprep.subr.bf16.mxu0 0
    %2444 = vmatpush1.bf16.msra.mxu0 %v2424
    %2445 = vmatprep.subr.bf16.mxu0 0
    %2446 = vmatpush1.bf16.msra.mxu0 %v2425
    %2447 = vmatprep.subr.bf16.mxu0 0
    %2448 = vmatpush1.bf16.msra.mxu0 %v2426
    %2449 = vmatprep.subr.bf16.mxu0 0
    %2450 = vmatpush1.bf16.msra.mxu0 %v2427
    %2451 = vmatprep.subr.bf16.mxu0 0
    %2452 = vmatpush1.bf16.msra.mxu0 %v2428
    %2453 = vmatprep.subr.bf16.mxu0 0
    %2454 = vmatpush1.bf16.msra.mxu0 0
    %2455 = vmatprep.subr.bf16.mxu0 0
    %2456 = vmatpush1.bf16.msra.mxu0 0
    %2457 = vmatprep.subr.bf16.mxu0 0
    %2458 = vmatpush1.bf16.msra.mxu0 0
    %2459 = vmatprep.subr.bf16.mxu0 0
    %2460 = vmatpush1.bf16.msra.mxu0 0
    %2461 = vmatprep.subr.bf16.mxu0 0
    %2462 = vmatpush1.bf16.msra.mxu0 0
    %2463 = vmatprep.subr.bf16.mxu0 0
    %2464 = vmatpush1.bf16.msra.mxu0 0
    %2465 = vmatprep.subr.bf16.mxu0 0
    %2466 = vmatpush1.bf16.msra.mxu0 0
    %2467 = vmatprep.subr.bf16.mxu0 0
    %2468 = vmatpush1.bf16.msra.mxu0 0
    %2469 = vmatprep.mubr.bf16.mxu0 0
    %2470 = vmatmul.mubr.bf16.gmra.mrb[0].mxu0 %v583
    %v2471 = vpop.f32.mrb[0].mxu0
    %v2472 = vadd.f32 0.0, %v2471
    %v2473 = vpop.f32.mrb[0].mxu0
    %v2474 = vpop.f32.mrb[0].mxu0
    %v2475 = vadd.f32 0.0, %v2474
    %v2476 = vpop.f32.mrb[0].mxu0
    %2477 = vmatprep.mubr.bf16.mxu0 0
    %2478 = vmatmul.mubr.bf16.gmra.mrb[0].mxu0 %v584
    %v2479 = vpop.f32.mrb[0].mxu0
    %v2480 = vadd.f32 0.0, %v2479
    %v2481 = vpop.f32.mrb[0].mxu0
    %v2482 = vpop.f32.mrb[0].mxu0
    %v2483 = vadd.f32 0.0, %v2482
    %v2484 = vpop.f32.mrb[0].mxu0
    %2485 = vmatprep.mubr.bf16.mxu0 0
    %2486 = vmatmul.mubr.bf16.gmra.mrb[0].mxu0 %v585
    %v2487 = vpop.f32.mrb[0].mxu0
    %v2488 = vadd.f32 0.0, %v2487
    %v2489 = vpop.f32.mrb[0].mxu0
    %v2490 = vpop.f32.mrb[0].mxu0
    %v2491 = vadd.f32 0.0, %v2490
    %v2492 = vpop.f32.mrb[0].mxu0
    %2493 = vmatprep.mubr.bf16.mxu0 0
    %2494 = vmatmul.mubr.bf16.gmra.mrb[0].mxu0 %v586
    %v2495 = vpop.f32.mrb[0].mxu0
    %v2496 = vadd.f32 0.0, %v2495
    %v2497 = vpop.f32.mrb[0].mxu0
    %v2498 = vpop.f32.mrb[0].mxu0
    %v2499 = vadd.f32 0.0, %v2498
    %v2500 = vpop.f32.mrb[0].mxu0
    %2501 = vdwg.mxu0
    %v2502 = vadd.f32 %v2364, %v2472
    %v2503 = vadd.f32 %v2365, %v2475
    %v2504 = vadd.f32 %v2366, %v2480
    %v2505 = vadd.f32 %v2367, %v2483
    %v2506 = vadd.f32 %v2368, %v2488
    %v2507 = vadd.f32 %v2369, %v2491
    %v2508 = vadd.f32 %v2370, %v2496
    %v2509 = vadd.f32 %v2371, %v2499
    %v2510 = vld [vmem:[%s3 + $0xe] sm:$0x1]
    %v2511 = vlaneseq
    %v2512 = vshrl.u32 %v2511, 7
    %v2513 = vsub.s32 0, %v2512
    %v2514 = vrot.slane %v2510, %v2513
    %v2515 = vadd.f32 %v2502, %v2514
    %v2516 = vadd.f32 %v2503, %v2514
    %v2517 = vadd.f32 %v2504, %v2514
    %v2518 = vadd.f32 %v2505, %v2514
    %v2519 = vadd.f32 %v2506, %v2514
    %v2520 = vadd.f32 %v2507, %v2514
    %v2521 = vadd.f32 %v2508, %v2514
    %v2522 = vadd.f32 %v2509, %v2514
    %v2523 = vsel %vm1817, %v2515, 0.0
    %v2524 = vsel %vm1817, %v2516, 0.0
    %v2525 = vsel %vm1817, %v2517, 0.0
    %v2526 = vsel %vm1817, %v2518, 0.0
    %v2527 = vsel %vm1817, %v2519, 0.0
    %v2528 = vsel %vm1817, %v2520, 0.0
    %v2529 = vsel %vm1817, %v2521, 0.0
    %v2530 = vsel %vm1817, %v2522, 0.0
    %v2531 = vmul.f32 %v2523, %v2523
    %v2532 = vmul.f32 %v2524, %v2524
    %v2533 = vmul.f32 %v2525, %v2525
    %v2534 = vmul.f32 %v2526, %v2526
    %v2535 = vmul.f32 %v2527, %v2527
    %v2536 = vmul.f32 %v2528, %v2528
    %v2537 = vmul.f32 %v2529, %v2529
    %v2538 = vmul.f32 %v2530, %v2530
    %2539 = vadd.xlane.f32.xlu0 %v2531
    %v2540 = vpop.xlane.xlu0 %2539
    %2541 = vadd.xlane.f32.xlu0 %v2532
    %v2542 = vpop.xlane.xlu0 %2541
    %2543 = vadd.xlane.f32.xlu0 %v2533
    %v2544 = vpop.xlane.xlu0 %2543
    %2545 = vadd.xlane.f32.xlu0 %v2534
    %v2546 = vpop.xlane.xlu0 %2545
    %2547 = vadd.xlane.f32.xlu0 %v2535
    %v2548 = vpop.xlane.xlu0 %2547
    %2549 = vadd.xlane.f32.xlu0 %v2536
    %v2550 = vpop.xlane.xlu0 %2549
    %2551 = vadd.xlane.f32.xlu0 %v2537
    %v2552 = vpop.xlane.xlu0 %2551
    %2553 = vadd.xlane.f32.xlu0 %v2538
    %v2554 = vpop.xlane.xlu0 %2553
    %v2555 = vmax.f32 %v2540, 1e-24
    %v2556 = vmax.f32 %v2542, 1e-24
    %v2557 = vmax.f32 %v2544, 1e-24
    %v2558 = vmax.f32 %v2546, 1e-24
    %v2559 = vmax.f32 %v2548, 1e-24
    %v2560 = vmax.f32 %v2550, 1e-24
    %v2561 = vmax.f32 %v2552, 1e-24
    %v2562 = vmax.f32 %v2554, 1e-24
    %v2563 = vrsqrt.pop %v2555
    %v2564 = vrsqrt.pop %v2556
    %v2565 = vrsqrt.pop %v2557
    %v2566 = vrsqrt.pop %v2558
    %v2567 = vrsqrt.pop %v2559
    %v2568 = vrsqrt.pop %v2560
    %v2569 = vrsqrt.pop %v2561
    %v2570 = vrsqrt.pop %v2562
    %v2571 = vmul.f32 %v2523, %v2563
    %v2572 = vmul.f32 %v2524, %v2564
    %v2573 = vmul.f32 %v2525, %v2565
    %v2574 = vmul.f32 %v2526, %v2566
    %v2575 = vmul.f32 %v2527, %v2567
    %v2576 = vmul.f32 %v2528, %v2568
    %v2577 = vmul.f32 %v2529, %v2569
    %v2578 = vmul.f32 %v2530, %v2570
    %v2579 = vmul.f32 %v2515, 0.5
    %v2580 = vmul.f32 %v2516, 0.5
    %v2581 = vmul.f32 %v2517, 0.5
    %v2582 = vmul.f32 %v2518, 0.5
    %v2583 = vmul.f32 %v2519, 0.5
    %v2584 = vmul.f32 %v2520, 0.5
    %v2585 = vmul.f32 %v2521, 0.5
    %v2586 = vmul.f32 %v2522, 0.5
    %v2587 = vtanh.pop %v2579
    %v2588 = vtanh.pop %v2580
    %v2589 = vtanh.pop %v2581
    %v2590 = vtanh.pop %v2582
    %v2591 = vtanh.pop %v2583
    %v2592 = vtanh.pop %v2584
    %v2593 = vtanh.pop %v2585
    %v2594 = vtanh.pop %v2586
    %v2595 = vadd.f32 %v2587, 1.0
    %v2596 = vadd.f32 %v2588, 1.0
    %v2597 = vadd.f32 %v2589, 1.0
    %v2598 = vadd.f32 %v2590, 1.0
    %v2599 = vadd.f32 %v2591, 1.0
    %v2600 = vadd.f32 %v2592, 1.0
    %v2601 = vadd.f32 %v2593, 1.0
    %v2602 = vadd.f32 %v2594, 1.0
    %v2603 = vmul.f32 %v2595, 0.5
    %v2604 = vmul.f32 %v2596, 0.5
    %v2605 = vmul.f32 %v2597, 0.5
    %v2606 = vmul.f32 %v2598, 0.5
    %v2607 = vmul.f32 %v2599, 0.5
    %v2608 = vmul.f32 %v2600, 0.5
    %v2609 = vmul.f32 %v2601, 0.5
    %v2610 = vmul.f32 %v2602, 0.5
    %vm2611 = vcmp.eq.s32.totalorder %v1816, 32
    %vm2612 = vcmp.eq.s32.totalorder %v1816, 33
    %vm2613 = vmor %vm2611, %vm2612
    %v2614 = vsel %vm2613, %v2603, 0.0
    %v2615 = vsel %vm2613, %v2604, 0.0
    %v2616 = vsel %vm2613, %v2605, 0.0
    %v2617 = vsel %vm2613, %v2606, 0.0
    %v2618 = vsel %vm2613, %v2607, 0.0
    %v2619 = vsel %vm2613, %v2608, 0.0
    %v2620 = vsel %vm2613, %v2609, 0.0
    %v2621 = vsel %vm2613, %v2610, 0.0
    %v2622 = vsel %vm1817, %v2571, %v2614
    %v2623 = vsel %vm1817, %v2572, %v2615
    %v2624 = vsel %vm1817, %v2573, %v2616
    %v2625 = vsel %vm1817, %v2574, %v2617
    %v2626 = vsel %vm1817, %v2575, %v2618
    %v2627 = vsel %vm1817, %v2576, %v2619
    %v2628 = vsel %vm1817, %v2577, %v2620
    %v2629 = vsel %vm1817, %v2578, %v2621
    %2630 = vst [vmem:[%s4] sm:$0xff] %v2622
    %2631 = vst [vmem:[%s4 + $0x8] sm:$0xff] %v2623
    %2632 = vst [vmem:[%s4 + $0x10] sm:$0xff] %v2624
    %2633 = vst [vmem:[%s4 + $0x18] sm:$0xff] %v2625
    %2634 = vst [vmem:[%s4 + $0x20] sm:$0xff] %v2626
    %2635 = vst [vmem:[%s4 + $0x28] sm:$0xff] %v2627
    %2636 = vst [vmem:[%s4 + $0x30] sm:$0xff] %v2628
    %2637 = vst [vmem:[%s4 + $0x38] sm:$0xff] %v2629
    // Predicated region
    $region22: #{kpfcnn_forward.1} parent=1 // pred_check
      _
    $region23: #{kpfcnn_forward.1} parent=1 // pred_check_branch
      %2639 = sbr.rel (0) target = $region25
    $region24: #{kpfcnn_forward.1} parent=1 // pred_region
      _
    $region25: #{kpfcnn_forward.1} parent=1 // pred_fallthru
      _
    // Predicated region
    $region26: #{kpfcnn_forward.1} parent=1 // pred_check
      _
    $region27: #{kpfcnn_forward.1} parent=1 // pred_check_branch
      %2641 = sbr.rel (0) target = $region29
    $region28: #{kpfcnn_forward.1} parent=1 // pred_region
      _
    $region29: #{kpfcnn_forward.1} parent=1 // pred_fallthru
      _
    %2642 = vsyncpa [#allocation5], 1

</llo_original>
